<compile_context>
chip_gen: v6e
topology: v6e:2x2x1
jax: 0.10.0
libtpu: 0.0.40
codegen_flags: <defaults>
</compile_context>

<pallas_src>
import functools

import jax
import jax.numpy as jnp
from jax.experimental import pallas as pl
from jax.experimental.pallas import tpu as pltpu


def _round_up(n, m):
    return ((n + m - 1) // m) * m


def _vmem_capacity_bytes():
    """Physical per-core VMEM; conservative fallback = 64 MiB (v7x per-TC)."""
    try:
        return int(pltpu.get_tpu_info().vmem_capacity_bytes)
    except Exception:
        return 64 * 1024 * 1024


# ----------------------------------------------------------------------------
# Fused Pallas kernel: all GIN layers + mean pool + classifier in one call.
# ----------------------------------------------------------------------------
def _gin_fused_kernel(num_layers, prefetch_layer,
                      # inputs
                      a_hbm, x_hbm, w_ref, b_ref, p_hbm, wc_hbm, bc_hbm,
                      # outputs
                      o_ref,
                      # scratch
                      a_vmem, h_vmem, p_vmem, wc_vmem, bc_vmem, sems):
    layer = pl.program_id(0)

    # ---- layer 0 prologue: single-buffered residents ------------------------
    @pl.when(layer == 0)
    def _():
        # A' -> single VMEM buffer; x -> directly into the h carry buffer.
        pltpu.make_async_copy(a_hbm, a_vmem, sems.at[0]).start()
        pltpu.make_async_copy(x_hbm, h_vmem, sems.at[1]).start()
        pltpu.make_async_copy(a_hbm, a_vmem, sems.at[0]).wait()
        pltpu.make_async_copy(x_hbm, h_vmem, sems.at[1]).wait()
        # Robustness: make sure the resident output block is always defined.
        o_ref[...] = jnp.zeros_like(o_ref)

    # ---- prefetch epilogue operands one layer early --------------------------
    @pl.when(layer == prefetch_layer)
    def _():
        pltpu.make_async_copy(p_hbm, p_vmem, sems.at[2]).start()
        pltpu.make_async_copy(wc_hbm, wc_vmem, sems.at[3]).start()
        pltpu.make_async_copy(bc_hbm, bc_vmem, sems.at[4]).start()

    # ---- one GIN layer -------------------------------------------------------
    h = h_vmem[...]                                              # bf16 (NP, D)

    # Neighbor sum + self term: A' already equals A + (1+eps)*I (host-folded).
    agg = jnp.dot(a_vmem[...], h, preferred_element_type=jnp.float32)

    # MLP: Linear -> ReLU -> Linear, entirely in VMEM, f32 accumulation.
    z = jnp.dot(agg.astype(jnp.bfloat16), w_ref[0],
                preferred_element_type=jnp.float32) + b_ref[0]
    z = jnp.maximum(z, 0.0)
    z = jnp.dot(z.astype(jnp.bfloat16), w_ref[1],
                preferred_element_type=jnp.float32) + b_ref[1]

    # Outer ReLU from GIN.forward; F.dropout(training=False) is the identity.
    h_new = jnp.maximum(z, 0.0)                                  # f32 (NP, D)
    h_vmem[...] = h_new.astype(jnp.bfloat16)

    # ---- epilogue on the last layer: mean pool + classifier ------------------
    @pl.when(layer == num_layers - 1)
    def _():
        pltpu.make_async_copy(p_hbm, p_vmem, sems.at[2]).wait()
        pltpu.make_async_copy(wc_hbm, wc_vmem, sems.at[3]).wait()
        pltpu.make_async_copy(bc_hbm, bc_vmem, sems.at[4]).wait()
        pooled = jnp.dot(p_vmem[...], h_new, preferred_element_type=jnp.float32)
        o_ref[...] = (jnp.dot(pooled, wc_vmem[...],
                              preferred_element_type=jnp.float32)
                      + bc_vmem[...])


# ----------------------------------------------------------------------------
# Host-side graph preprocessing (padding kept zero so it never pollutes output)
# ----------------------------------------------------------------------------
def edge_index_to_gin_adj(edge_index, num_nodes, num_nodes_pad, eps=0.0):
    """A'[dst, src] = multiplicity of edge src->dst, plus (1+eps) on the real
    diagonal.  0/1/small-integer values and eps=0 are exact in bf16 (other eps
    values get rounded to bf16)."""
    src, dst = edge_index[0], edge_index[1]
    adj = jnp.zeros((num_nodes_pad, num_nodes_pad), jnp.float32)
    adj = adj.at[dst, src].add(1.0)
    diag = jnp.where(jnp.arange(num_nodes_pad) < num_nodes, 1.0 + eps, 0.0)
    adj = adj + jnp.diag(diag)
    return adj.astype(jnp.bfloat16)


def batch_to_mean_pool_matrix(batch, num_nodes, num_graphs, num_graphs_pad,
                              num_nodes_pad):
    """P[b, n] = 1/|nodes in graph b| if batch[n] == b else 0 (padded cols 0)."""
    batch_pad = jnp.full((num_nodes_pad,), -1, jnp.int32)
    batch_pad = batch_pad.at[:num_nodes].set(batch.astype(jnp.int32))
    one_hot = (batch_pad[None, :] ==
               jnp.arange(num_graphs_pad, dtype=jnp.int32)[:, None]
               ).astype(jnp.float32)
    counts = jnp.maximum(one_hot.sum(axis=1, keepdims=True), 1.0)
    return one_hot / counts                                      # f32 (BP, NP)


# ----------------------------------------------------------------------------
# Parameters (real shapes mirror the PyTorch module; padded+stacked for kernel)
# ----------------------------------------------------------------------------
def init_gin_params(key, num_features, num_classes, hidden_dim, num_layers):
    d_pad = max(_round_up(num_features, 128), _round_up(hidden_dim, 128))
    c_pad = _round_up(num_classes, 128)

    w_l, b_l = [], []
    ref_layers = []
    f_in = num_features
    for _ in range(num_layers):
        key, k1, kb1, k2, kb2 = jax.random.split(key, 5)
        w1 = jax.random.normal(k1, (f_in, hidden_dim), jnp.float32) * 0.1
        b1 = jax.random.normal(kb1, (hidden_dim,), jnp.float32) * 0.05
        w2 = jax.random.normal(k2, (hidden_dim, hidden_dim), jnp.float32) * 0.1
        b2 = jax.random.normal(kb2, (hidden_dim,), jnp.float32) * 0.05
        ref_layers.append((w1, b1, w2, b2))

        w_pad = jnp.zeros((2, d_pad, d_pad), jnp.float32)
        w_pad = w_pad.at[0, :f_in, :hidden_dim].set(w1)
        w_pad = w_pad.at[1, :hidden_dim, :hidden_dim].set(w2)
        w_l.append(w_pad)

        b_pad = jnp.zeros((2, 1, d_pad), jnp.float32)
        b_pad = b_pad.at[0, 0, :hidden_dim].set(b1)
        b_pad = b_pad.at[1, 0, :hidden_dim].set(b2)
        b_l.append(b_pad)
        f_in = hidden_dim

    key, kc, kbc = jax.random.split(key, 3)
    wc = jax.random.normal(kc, (hidden_dim, num_classes), jnp.float32) * 0.1
    bc = jax.random.normal(kbc, (num_classes,), jnp.float32) * 0.05

    return {
        # single streamed weight stack and single streamed bias stack per layer
        "ws": jnp.stack(w_l).astype(jnp.bfloat16),               # (L,2,D,D) bf16
        "bs": jnp.stack(b_l),                                    # (L,2,1,D) f32
        "wc": jnp.zeros((d_pad, c_pad), jnp.float32)
              .at[:hidden_dim, :num_classes].set(wc),            # (D, CP) f32
        "bc": jnp.zeros((1, c_pad), jnp.float32)
              .at[0, :num_classes].set(bc),                      # (1, CP) f32
        "ref_layers": ref_layers, "ref_wc": wc, "ref_bc": bc,
        "num_classes": num_classes, "d_pad": d_pad, "c_pad": c_pad,
    }


# ----------------------------------------------------------------------------
# Forward pass: one fused pallas_call
# ----------------------------------------------------------------------------
def gin_forward(params, x, edge_index, batch, num_graphs, eps=0.0):
    num_nodes, num_features = x.shape
    d_pad = params["d_pad"]
    c_pad = params["c_pad"]
    num_layers = params["ws"].shape[0]

    np_pad = _round_up(num_nodes, 128)    # lane-dense node dim for A' / A'@h
    bp_pad = _round_up(num_graphs, 8)     # sublane-aligned graph dim

    adj = edge_index_to_gin_adj(edge_index, num_nodes, np_pad, eps)      # bf16
    xp = (jnp.zeros((np_pad, d_pad), jnp.bfloat16)
          .at[:num_nodes, :num_features].set(x.astype(jnp.bfloat16)))
    pmat = batch_to_mean_pool_matrix(batch, num_nodes, num_graphs,
                                     bp_pad, np_pad)                      # f32

    # A' / x / pool / classifier stay in HBM (pl.ANY) and are DMA'd manually
    # into single-buffered VMEM scratch; only the per-layer weight/bias stacks
    # are streamed (double-buffered) through BlockSpecs.
    in_specs = [
        pl.BlockSpec(memory_space=pl.ANY),                         # A'
        pl.BlockSpec(memory_space=pl.ANY),                         # x
        pl.BlockSpec((None, 2, d_pad, d_pad), lambda l: (l, 0, 0, 0)),  # W[l]
        pl.BlockSpec((None, 2, 1, d_pad), lambda l: (l, 0, 0, 0)),      # b[l]
        pl.BlockSpec(memory_space=pl.ANY),                         # pool matrix
        pl.BlockSpec(memory_space=pl.ANY),                         # Wc
        pl.BlockSpec(memory_space=pl.ANY),                         # bc
    ]
    out_spec = pl.BlockSpec((bp_pad, c_pad), lambda l: (0, 0))

    scratch_shapes = [
        pltpu.VMEM((np_pad, np_pad), jnp.bfloat16),   # A' (single buffer)
        pltpu.VMEM((np_pad, d_pad), jnp.bfloat16),    # h carry (also holds x)
        pltpu.VMEM((bp_pad, np_pad), jnp.float32),    # pool matrix
        pltpu.VMEM((d_pad, c_pad), jnp.float32),      # Wc
        pltpu.VMEM((1, c_pad), jnp.float32),          # bc
        pltpu.SemaphoreType.DMA((5,)),
    ]

    # Exact VMEM accounting: single-buffered residents + double-buffered
    # streamed per-layer blocks + out tile + headroom, capped at physical VMEM.
    resident = (np_pad * np_pad * 2 + np_pad * d_pad * 2
                + bp_pad * np_pad * 4 + d_pad * c_pad * 4 + c_pad * 4)
    streamed = 2 * (2 * d_pad * d_pad * 2 + 2 * 1 * d_pad * 4)
    out_bytes = 2 * bp_pad * c_pad * 4
    needed = resident + streamed + out_bytes
    vmem_limit = int(min(_vmem_capacity_bytes(),
                         max(16 * 1024 * 1024, needed + 4 * 1024 * 1024)))

    flops = int(num_layers * (2 * np_pad * np_pad * d_pad            # A' @ h
                              + 2 * 2 * np_pad * d_pad * d_pad)      # MLP matmuls
                + 2 * bp_pad * np_pad * d_pad                        # pooling
                + 2 * bp_pad * d_pad * c_pad)                        # classifier
    bytes_accessed = int(adj.nbytes + xp.nbytes + pmat.nbytes
                         + params["ws"].nbytes + params["bs"].nbytes
                         + params["wc"].nbytes + params["bc"].nbytes
                         + bp_pad * c_pad * 4)

    prefetch_layer = max(num_layers - 2, 0)
    kernel = functools.partial(_gin_fused_kernel, num_layers, prefetch_layer)

    out_padded = pl.pallas_call(
        kernel,
        out_shape=jax.ShapeDtypeStruct((bp_pad, c_pad), jnp.float32),
        grid_spec=pltpu.PrefetchScalarGridSpec(
            num_scalar_prefetch=0,
            grid=(num_layers,),
            in_specs=in_specs,
            out_specs=out_spec,
            scratch_shapes=scratch_shapes,
        ),
        compiler_params=pltpu.CompilerParams(
            # layer axis is a sequential carried loop -> "arbitrary"
            dimension_semantics=("arbitrary",),
            vmem_limit_bytes=vmem_limit,
        ),
        cost_estimate=pl.CostEstimate(
            flops=flops, transcendentals=0, bytes_accessed=bytes_accessed),
    )(adj, xp, params["ws"], params["bs"], pmat, params["wc"], params["bc"])

    return out_padded[:num_graphs, :params["num_classes"]]


# ----------------------------------------------------------------------------
# Pure-JAX reference (mirrors the PyTorch module exactly, f32 throughout)
# ----------------------------------------------------------------------------
def gin_reference(params, x, edge_index, batch, num_graphs, eps=0.0):
    src, dst = edge_index[0], edge_index[1]
    h = x
    for (w1, b1, w2, b2) in params["ref_layers"]:
        agg = (1.0 + eps) * h + jnp.zeros_like(h).at[dst].add(h[src])
        z = jnp.maximum(agg @ w1 + b1, 0.0)
        h = jnp.maximum(z @ w2 + b2, 0.0)        # outer ReLU; dropout eval = id
    one_hot = (batch[None, :] == jnp.arange(num_graphs)[:, None]).astype(h.dtype)
    counts = jnp.maximum(one_hot.sum(axis=1, keepdims=True), 1.0)
    pooled = (one_hot @ h) / counts
    return pooled @ params["ref_wc"] + params["ref_bc"]


# ----------------------------------------------------------------------------
# Demo
# ----------------------------------------------------------------------------
if __name__ == "__main__":
    num_features = 8
    hidden_dim = 32
    num_classes = 3
    num_layers = 3
    num_nodes = 16        # two graphs of 8 nodes each
    num_graphs = 2

    key = jax.random.PRNGKey(0)
    key, kx = jax.random.split(key)
    x = jax.random.normal(kx, (num_nodes, num_features), jnp.float32)

    # deterministic edge_index: ring within each graph (both directions)
    src_list, dst_list = [], []
    nodes_per_graph = num_nodes // num_graphs
    for g in range(num_graphs):
        base = g * nodes_per_graph
        for i in range(nodes_per_graph):
            a = base + i
            b = base + (i + 1) % nodes_per_graph
            src_list += [a, b]
            dst_list += [b, a]
    edge_index = jnp.array([src_list, dst_list], dtype=jnp.int32)
    batch = jnp.repeat(jnp.arange(num_graphs, dtype=jnp.int32), nodes_per_graph)

    params = init_gin_params(key, num_features, num_classes, hidden_dim,
                             num_layers)

    out = gin_forward(params, x, edge_index, batch, num_graphs)
    out = jax.block_until_ready(out)
    assert out.shape == (num_graphs, num_classes)

    ref = gin_reference(params, x, edge_index, batch, num_graphs)
    max_diff = float(jnp.max(jnp.abs(out - ref)))
    assert jnp.allclose(out, ref, atol=5e-2, rtol=5e-2), f"max diff {max_diff}"

    print("KERNEL_OK")
</pallas_src>

<mosaic_0001>
module attributes {stable_mosaic.version = 11 : i64} {
  func.func @_gin_fused_kernel(%arg0: i32, %arg1: memref<128x128xbf16, #tpu.memory_space<any>>, %arg2: memref<128x128xbf16, #tpu.memory_space<any>>, %arg3: memref<1x2x128x128xbf16, #tpu.memory_space<vmem>>, %arg4: memref<1x2x1x128xf32, #tpu.memory_space<vmem>>, %arg5: memref<8x128xf32, #tpu.memory_space<any>>, %arg6: memref<128x128xf32, #tpu.memory_space<any>>, %arg7: memref<1x128xf32, #tpu.memory_space<any>>, %arg8: memref<8x128xf32, #tpu.memory_space<vmem>>, %arg9: memref<128x128xbf16, #tpu.memory_space<vmem>>, %arg10: memref<128x128xbf16, #tpu.memory_space<vmem>>, %arg11: memref<8x128xf32, #tpu.memory_space<vmem>>, %arg12: memref<128x128xf32, #tpu.memory_space<vmem>>, %arg13: memref<1x128xf32, #tpu.memory_space<vmem>>, %arg14: memref<5x!tpu.dma_semaphore, #tpu.memory_space<semaphore_mem>>) attributes {dimension_semantics = [#tpu.dimension_semantics<arbitrary>], iteration_bounds = array<i64: 3>, scalar_prefetch = 0 : i64, scratch_operands = 6 : i64, tpu.core_type = #tpu.core_type<tc>, window_params = [{}, {}, {transform_indices = @transform_2, window_bounds = array<i64: 1, 2, 128, 128>}, {transform_indices = @transform_3, window_bounds = array<i64: 1, 2, 1, 128>}, {}, {}, {}, {pipeline_mode = #tpu.pipeline_mode<synchronous>, transform_indices = @transform_7, window_bounds = array<i64: 8, 128>}]} {
    %c0_i32 = arith.constant 0 : i32
    %0 = arith.cmpi eq, %arg0, %c0_i32 : i32
    %1 = arith.extui %0 : i1 to i32
    %c0_i32_0 = arith.constant 0 : i32
    %2 = arith.cmpi ne, %1, %c0_i32_0 : i32
    scf.if %2 {
      %c0_i32_27 = arith.constant 0 : i32
      %34 = tpu.memref_slice %arg14[%c0_i32_27] : memref<5x!tpu.dma_semaphore, #tpu.memory_space<semaphore_mem>> -> memref<1x!tpu.dma_semaphore, #tpu.memory_space<semaphore_mem>>
      %35 = tpu.memref_squeeze %34 : memref<1x!tpu.dma_semaphore, #tpu.memory_space<semaphore_mem>> -> memref<!tpu.dma_semaphore, #tpu.memory_space<semaphore_mem>>
      tpu.enqueue_dma source(%arg1 : memref<128x128xbf16, #tpu.memory_space<any>>) target(%arg9 : memref<128x128xbf16, #tpu.memory_space<vmem>>) target_semaphore(%35 : memref<!tpu.dma_semaphore, #tpu.memory_space<semaphore_mem>>)
      %c1_i32_28 = arith.constant 1 : i32
      %36 = tpu.memref_slice %arg14[%c1_i32_28] : memref<5x!tpu.dma_semaphore, #tpu.memory_space<semaphore_mem>> -> memref<1x!tpu.dma_semaphore, #tpu.memory_space<semaphore_mem>>
      %37 = tpu.memref_squeeze %36 : memref<1x!tpu.dma_semaphore, #tpu.memory_space<semaphore_mem>> -> memref<!tpu.dma_semaphore, #tpu.memory_space<semaphore_mem>>
      tpu.enqueue_dma source(%arg2 : memref<128x128xbf16, #tpu.memory_space<any>>) target(%arg10 : memref<128x128xbf16, #tpu.memory_space<vmem>>) target_semaphore(%37 : memref<!tpu.dma_semaphore, #tpu.memory_space<semaphore_mem>>)
      %c0_i32_29 = arith.constant 0 : i32
      %38 = tpu.memref_slice %arg14[%c0_i32_29] : memref<5x!tpu.dma_semaphore, #tpu.memory_space<semaphore_mem>> -> memref<1x!tpu.dma_semaphore, #tpu.memory_space<semaphore_mem>>
      %39 = tpu.memref_squeeze %38 : memref<1x!tpu.dma_semaphore, #tpu.memory_space<semaphore_mem>> -> memref<!tpu.dma_semaphore, #tpu.memory_space<semaphore_mem>>
      tpu.wait_dma2 semaphore(%39 : memref<!tpu.dma_semaphore, #tpu.memory_space<semaphore_mem>>) src(%arg1 : memref<128x128xbf16, #tpu.memory_space<any>>) dst(%arg9 : memref<128x128xbf16, #tpu.memory_space<vmem>>)
      %c1_i32_30 = arith.constant 1 : i32
      %40 = tpu.memref_slice %arg14[%c1_i32_30] : memref<5x!tpu.dma_semaphore, #tpu.memory_space<semaphore_mem>> -> memref<1x!tpu.dma_semaphore, #tpu.memory_space<semaphore_mem>>
      %41 = tpu.memref_squeeze %40 : memref<1x!tpu.dma_semaphore, #tpu.memory_space<semaphore_mem>> -> memref<!tpu.dma_semaphore, #tpu.memory_space<semaphore_mem>>
      tpu.wait_dma2 semaphore(%41 : memref<!tpu.dma_semaphore, #tpu.memory_space<semaphore_mem>>) src(%arg2 : memref<128x128xbf16, #tpu.memory_space<any>>) dst(%arg10 : memref<128x128xbf16, #tpu.memory_space<vmem>>)
      %cst_31 = arith.constant 0.000000e+00 : f32
      %42 = vector.broadcast %cst_31 : f32 to vector<8x128xf32>
      %c0_32 = arith.constant 0 : index
      %c0_33 = arith.constant 0 : index
      %43 = vector.load %arg8[%c0_32, %c0_33] : memref<8x128xf32, #tpu.memory_space<vmem>>, vector<8x128xf32>
      tpu.vector_store %arg8[%c0_32, %c0_33], %42 {strides = array<i32>} : memref<8x128xf32, #tpu.memory_space<vmem>>, vector<8x128xf32>,
    } else {
    }
    %c1_i32 = arith.constant 1 : i32
    %3 = arith.cmpi eq, %arg0, %c1_i32 : i32
    %4 = arith.extui %3 : i1 to i32
    %c0_i32_1 = arith.constant 0 : i32
    %5 = arith.cmpi ne, %4, %c0_i32_1 : i32
    scf.if %5 {
      %c2_i32_27 = arith.constant 2 : i32
      %34 = tpu.memref_slice %arg14[%c2_i32_27] : memref<5x!tpu.dma_semaphore, #tpu.memory_space<semaphore_mem>> -> memref<1x!tpu.dma_semaphore, #tpu.memory_space<semaphore_mem>>
      %35 = tpu.memref_squeeze %34 : memref<1x!tpu.dma_semaphore, #tpu.memory_space<semaphore_mem>> -> memref<!tpu.dma_semaphore, #tpu.memory_space<semaphore_mem>>
      tpu.enqueue_dma source(%arg5 : memref<8x128xf32, #tpu.memory_space<any>>) target(%arg11 : memref<8x128xf32, #tpu.memory_space<vmem>>) target_semaphore(%35 : memref<!tpu.dma_semaphore, #tpu.memory_space<semaphore_mem>>)
      %c3_i32 = arith.constant 3 : i32
      %36 = tpu.memref_slice %arg14[%c3_i32] : memref<5x!tpu.dma_semaphore, #tpu.memory_space<semaphore_mem>> -> memref<1x!tpu.dma_semaphore, #tpu.memory_space<semaphore_mem>>
      %37 = tpu.memref_squeeze %36 : memref<1x!tpu.dma_semaphore, #tpu.memory_space<semaphore_mem>> -> memref<!tpu.dma_semaphore, #tpu.memory_space<semaphore_mem>>
      tpu.enqueue_dma source(%arg6 : memref<128x128xf32, #tpu.memory_space<any>>) target(%arg12 : memref<128x128xf32, #tpu.memory_space<vmem>>) target_semaphore(%37 : memref<!tpu.dma_semaphore, #tpu.memory_space<semaphore_mem>>)
      %c4_i32 = arith.constant 4 : i32
      %38 = tpu.memref_slice %arg14[%c4_i32] : memref<5x!tpu.dma_semaphore, #tpu.memory_space<semaphore_mem>> -> memref<1x!tpu.dma_semaphore, #tpu.memory_space<semaphore_mem>>
      %39 = tpu.memref_squeeze %38 : memref<1x!tpu.dma_semaphore, #tpu.memory_space<semaphore_mem>> -> memref<!tpu.dma_semaphore, #tpu.memory_space<semaphore_mem>>
      tpu.enqueue_dma source(%arg7 : memref<1x128xf32, #tpu.memory_space<any>>) target(%arg13 : memref<1x128xf32, #tpu.memory_space<vmem>>) target_semaphore(%39 : memref<!tpu.dma_semaphore, #tpu.memory_space<semaphore_mem>>)
    } else {
    }
    %c0 = arith.constant 0 : index
    %c0_2 = arith.constant 0 : index
    %6 = vector.load %arg10[%c0, %c0_2] : memref<128x128xbf16, #tpu.memory_space<vmem>>, vector<128x128xbf16>
    %c0_3 = arith.constant 0 : index
    %c0_4 = arith.constant 0 : index
    %7 = vector.load %arg9[%c0_3, %c0_4] : memref<128x128xbf16, #tpu.memory_space<vmem>>, vector<128x128xbf16>
    %cst = arith.constant dense<0.000000e+00> : vector<128x128xf32>
    %8 = tpu.matmul %7, %6, %cst {dimension_numbers = #tpu.dot_dimension_numbers<[1], [0], [0], [1], [0, 0, 1, 1], [], []>} : vector<128x128xbf16>, vector<128x128xbf16>, vector<128x128xf32> -> vector<128x128xf32>
    %9 = arith.truncf %8 : vector<128x128xf32> to vector<128x128xbf16>
    %c0_5 = arith.constant 0 : index
    %c0_6 = arith.constant 0 : index
    %c0_7 = arith.constant 0 : index
    %c0_8 = arith.constant 0 : index
    %10 = vector.load %arg3[%c0_5, %c0_6, %c0_7, %c0_8] : memref<1x2x128x128xbf16, #tpu.memory_space<vmem>>, vector<1x1x128x128xbf16>
    %11 = vector.shape_cast %10 : vector<1x1x128x128xbf16> to vector<128x128xbf16>
    %cst_9 = arith.constant dense<0.000000e+00> : vector<128x128xf32>
    %12 = tpu.matmul %9, %11, %cst_9 {dimension_numbers = #tpu.dot_dimension_numbers<[1], [0], [0], [1], [0, 0, 1, 1], [], []>} : vector<128x128xbf16>, vector<128x128xbf16>, vector<128x128xf32> -> vector<128x128xf32>
    %c0_10 = arith.constant 0 : index
    %c0_11 = arith.constant 0 : index
    %c0_12 = arith.constant 0 : index
    %c0_13 = arith.constant 0 : index
    %13 = vector.load %arg4[%c0_10, %c0_11, %c0_12, %c0_13] : memref<1x2x1x128xf32, #tpu.memory_space<vmem>>, vector<1x1x1x128xf32>
    %14 = vector.shape_cast %13 : vector<1x1x1x128xf32> to vector<1x128xf32>
    %15 = vector.broadcast %14 : vector<1x128xf32> to vector<128x128xf32>
    %16 = arith.addf %12, %15 : vector<128x128xf32>
    %cst_14 = arith.constant 0.000000e+00 : f32
    %17 = vector.broadcast %cst_14 : f32 to vector<128x128xf32>
    %18 = arith.maximumf %16, %17 : vector<128x128xf32>
    %19 = arith.truncf %18 : vector<128x128xf32> to vector<128x128xbf16>
    %c0_15 = arith.constant 0 : index
    %c1 = arith.constant 1 : index
    %c0_16 = arith.constant 0 : index
    %c0_17 = arith.constant 0 : index
    %20 = vector.load %arg3[%c0_15, %c1, %c0_16, %c0_17] : memref<1x2x128x128xbf16, #tpu.memory_space<vmem>>, vector<1x1x128x128xbf16>
    %21 = vector.shape_cast %20 : vector<1x1x128x128xbf16> to vector<128x128xbf16>
    %cst_18 = arith.constant dense<0.000000e+00> : vector<128x128xf32>
    %22 = tpu.matmul %19, %21, %cst_18 {dimension_numbers = #tpu.dot_dimension_numbers<[1], [0], [0], [1], [0, 0, 1, 1], [], []>} : vector<128x128xbf16>, vector<128x128xbf16>, vector<128x128xf32> -> vector<128x128xf32>
    %c0_19 = arith.constant 0 : index
    %c1_20 = arith.constant 1 : index
    %c0_21 = arith.constant 0 : index
    %c0_22 = arith.constant 0 : index
    %23 = vector.load %arg4[%c0_19, %c1_20, %c0_21, %c0_22] : memref<1x2x1x128xf32, #tpu.memory_space<vmem>>, vector<1x1x1x128xf32>
    %24 = vector.shape_cast %23 : vector<1x1x1x128xf32> to vector<1x128xf32>
    %25 = vector.broadcast %24 : vector<1x128xf32> to vector<128x128xf32>
    %26 = arith.addf %22, %25 : vector<128x128xf32>
    %cst_23 = arith.constant 0.000000e+00 : f32
    %27 = vector.broadcast %cst_23 : f32 to vector<128x128xf32>
    %28 = arith.maximumf %26, %27 : vector<128x128xf32>
    %29 = arith.truncf %28 : vector<128x128xf32> to vector<128x128xbf16>
    %c0_24 = arith.constant 0 : index
    %c0_25 = arith.constant 0 : index
    %30 = vector.load %arg10[%c0_24, %c0_25] : memref<128x128xbf16, #tpu.memory_space<vmem>>, vector<128x128xbf16>
    tpu.vector_store %arg10[%c0_24, %c0_25], %29 {strides = array<i32>} : memref<128x128xbf16, #tpu.memory_space<vmem>>, vector<128x128xbf16>,
    %c2_i32 = arith.constant 2 : i32
    %31 = arith.cmpi eq, %arg0, %c2_i32 : i32
    %32 = arith.extui %31 : i1 to i32
    %c0_i32_26 = arith.constant 0 : i32
    %33 = arith.cmpi ne, %32, %c0_i32_26 : i32
    scf.if %33 {
      %c2_i32_27 = arith.constant 2 : i32
      %34 = tpu.memref_slice %arg14[%c2_i32_27] : memref<5x!tpu.dma_semaphore, #tpu.memory_space<semaphore_mem>> -> memref<1x!tpu.dma_semaphore, #tpu.memory_space<semaphore_mem>>
      %35 = tpu.memref_squeeze %34 : memref<1x!tpu.dma_semaphore, #tpu.memory_space<semaphore_mem>> -> memref<!tpu.dma_semaphore, #tpu.memory_space<semaphore_mem>>
      tpu.wait_dma2 semaphore(%35 : memref<!tpu.dma_semaphore, #tpu.memory_space<semaphore_mem>>) src(%arg5 : memref<8x128xf32, #tpu.memory_space<any>>) dst(%arg11 : memref<8x128xf32, #tpu.memory_space<vmem>>)
      %c3_i32 = arith.constant 3 : i32
      %36 = tpu.memref_slice %arg14[%c3_i32] : memref<5x!tpu.dma_semaphore, #tpu.memory_space<semaphore_mem>> -> memref<1x!tpu.dma_semaphore, #tpu.memory_space<semaphore_mem>>
      %37 = tpu.memref_squeeze %36 : memref<1x!tpu.dma_semaphore, #tpu.memory_space<semaphore_mem>> -> memref<!tpu.dma_semaphore, #tpu.memory_space<semaphore_mem>>
      tpu.wait_dma2 semaphore(%37 : memref<!tpu.dma_semaphore, #tpu.memory_space<semaphore_mem>>) src(%arg6 : memref<128x128xf32, #tpu.memory_space<any>>) dst(%arg12 : memref<128x128xf32, #tpu.memory_space<vmem>>)
      %c4_i32 = arith.constant 4 : i32
      %38 = tpu.memref_slice %arg14[%c4_i32] : memref<5x!tpu.dma_semaphore, #tpu.memory_space<semaphore_mem>> -> memref<1x!tpu.dma_semaphore, #tpu.memory_space<semaphore_mem>>
      %39 = tpu.memref_squeeze %38 : memref<1x!tpu.dma_semaphore, #tpu.memory_space<semaphore_mem>> -> memref<!tpu.dma_semaphore, #tpu.memory_space<semaphore_mem>>
      tpu.wait_dma2 semaphore(%39 : memref<!tpu.dma_semaphore, #tpu.memory_space<semaphore_mem>>) src(%arg7 : memref<1x128xf32, #tpu.memory_space<any>>) dst(%arg13 : memref<1x128xf32, #tpu.memory_space<vmem>>)
      %c0_28 = arith.constant 0 : index
      %c0_29 = arith.constant 0 : index
      %40 = vector.load %arg11[%c0_28, %c0_29] : memref<8x128xf32, #tpu.memory_space<vmem>>, vector<8x128xf32>
      %cst_30 = arith.constant dense<0.000000e+00> : vector<8x128xf32>
      %41 = tpu.matmul %40, %28, %cst_30 {dimension_numbers = #tpu.dot_dimension_numbers<[1], [0], [0], [1], [0, 0, 1, 1], [], []>} : vector<8x128xf32>, vector<128x128xf32>, vector<8x128xf32> -> vector<8x128xf32>
      %c0_31 = arith.constant 0 : index
      %c0_32 = arith.constant 0 : index
      %42 = vector.load %arg12[%c0_31, %c0_32] : memref<128x128xf32, #tpu.memory_space<vmem>>, vector<128x128xf32>
      %cst_33 = arith.constant dense<0.000000e+00> : vector<8x128xf32>
      %43 = tpu.matmul %41, %42, %cst_33 {dimension_numbers = #tpu.dot_dimension_numbers<[1], [0], [0], [1], [0, 0, 1, 1], [], []>} : vector<8x128xf32>, vector<128x128xf32>, vector<8x128xf32> -> vector<8x128xf32>
      %c0_34 = arith.constant 0 : index
      %c0_35 = arith.constant 0 : index
      %44 = vector.load %arg13[%c0_34, %c0_35] : memref<1x128xf32, #tpu.memory_space<vmem>>, vector<1x128xf32>
      %45 = vector.broadcast %44 : vector<1x128xf32> to vector<8x128xf32>
      %46 = arith.addf %43, %45 : vector<8x128xf32>
      %c0_36 = arith.constant 0 : index
      %c0_37 = arith.constant 0 : index
      %47 = vector.load %arg8[%c0_36, %c0_37] : memref<8x128xf32, #tpu.memory_space<vmem>>, vector<8x128xf32>
      tpu.vector_store %arg8[%c0_36, %c0_37], %46 {strides = array<i32>} : memref<8x128xf32, #tpu.memory_space<vmem>>, vector<8x128xf32>,
    } else {
    }
    return
  }
  func.func @transform_2(%arg0: i32) -> (i32, i32, i32, i32) {
    %c0_i32 = arith.constant 0 : i32
    %c0_i32_0 = arith.constant 0 : i32
    %c0_i32_1 = arith.constant 0 : i32
    %c0_i32_2 = arith.constant 0 : i32
    return %arg0, %c0_i32, %c0_i32_0, %c0_i32_1 : i32, i32, i32, i32
  }
  func.func @transform_3(%arg0: i32) -> (i32, i32, i32, i32) {
    %c0_i32 = arith.constant 0 : i32
    %c0_i32_0 = arith.constant 0 : i32
    %c0_i32_1 = arith.constant 0 : i32
    %c0_i32_2 = arith.constant 0 : i32
    return %arg0, %c0_i32, %c0_i32_0, %c0_i32_1 : i32, i32, i32, i32
  }
  func.func @transform_7(%arg0: i32) -> (i32, i32) {
    %c0_i32 = arith.constant 0 : i32
    %c0_i32_0 = arith.constant 0 : i32
    %c0_i32_1 = arith.constant 0 : i32
    return %c0_i32, %c0_i32_0 : i32, i32
  }
}

</mosaic_0001>

<llo_original>
// kernel: tpu_custom_call.1
$region0: #{tpu_custom_call.1}
  #allocation0 [shape = 'u32[]', space=smem, size = 0x4, offset = 0x4, fixed_abs, tag = 'smem constant byte address 0x4 - core index']
  #allocation1 [shape = 'u32[144,128]{1,0:T(1,128)}', space=vmem, size = 0x12000, scoped, tag = 'internal scratch']
  #allocation2 [shape = 'bf16[128,128]{1,0:T(8,128)(2,1)}', space=vmem, size = 0x8000, scoped, tag = 'scratch operand']
  #allocation3 [shape = 'bf16[128,128]{1,0:T(8,128)(2,1)}', space=vmem, size = 0x8000, scoped, tag = 'scratch operand']
  #allocation4 [shape = 'f32[8,128]{1,0:T(8,128)}', space=vmem, size = 0x1000, scoped, tag = 'scratch operand']
  #allocation5 [shape = 'f32[128,128]{1,0:T(8,128)}', space=vmem, size = 0x10000, scoped, tag = 'scratch operand']
  #allocation6 [shape = 'f32[1,128]{1,0:T(1,128)}', space=vmem, size = 0x200, scoped, tag = 'scratch operand']
  #allocation7 [shape = 's32[5]{0}', space=sflag, size = 0x14, scoped, tag = 'scratch operand']
  #allocation14 [shape = 's32[]', space=sflag, size = 0x4, offset = 0, fixed_abs, tag = 'sflag constant byte address 0x0 - dummy sync flag']
  #allocation15 [shape = 's32[]', space=sflag, size = 0x4, offset = 0, fixed_abs, tag = 'sflag constant byte address 0x0 - dummy sync flag']
  #allocation16 [shape = 'u32[]', space=smem, size = 0x4, offset = 0x44, fixed_abs, tag = 'smem constant byte address 0x44 - assertion arg 0']
  #allocation17 [shape = 'u32[]', space=smem, size = 0x4, offset = 0x48, fixed_abs, tag = 'smem constant byte address 0x48 - assertion arg 1']
  #allocation18 [shape = 's32[]', space=sflag, size = 0x4, offset = 0, fixed_abs, tag = 'sflag constant byte address 0x0 - dummy sync flag']
  #allocation19 [shape = 's32[]', space=sflag, size = 0x4, offset = 0, fixed_abs, tag = 'sflag constant byte address 0x0 - dummy sync flag']
  #allocation20 [shape = 's32[]', space=sflag, size = 0x4, offset = 0, fixed_abs, tag = 'sflag constant byte address 0x0 - dummy sync flag']
  #allocation21 [shape = 's32[]', space=sflag, size = 0x4, offset = 0, fixed_abs, tag = 'sflag constant byte address 0x0 - dummy sync flag']
  #allocation22 [shape = 's32[]', space=sflag, size = 0x4, offset = 0, fixed_abs, tag = 'sflag constant byte address 0x0 - dummy sync flag']
  #allocation23 [shape = 's32[]', space=sflag, size = 0x4, offset = 0, fixed_abs, tag = 'sflag constant byte address 0x0 - dummy sync flag']
  #allocation24 [shape = 's32[]', space=sflag, size = 0x4, offset = 0, fixed_abs, tag = 'sflag constant byte address 0x0 - dummy sync flag']
  %s0 = inlined_call_operand.hbm [shape: bf16[128,128], index: 0, kind: input, shape index: {}]
  %s1 = inlined_call_operand.hbm [shape: bf16[128,128], index: 1, kind: input, shape index: {}]
  %s2 = inlined_call_operand.hbm [shape: bf16[3,2,128,128], index: 2, kind: input, shape index: {}]
  %s3 = inlined_call_operand.hbm [shape: f32[3,2,1,128], index: 3, kind: input, shape index: {}]
  %s4 = inlined_call_operand.hbm [shape: f32[8,128], index: 4, kind: input, shape index: {}]
  %s5 = inlined_call_operand.hbm [shape: f32[128,128], index: 5, kind: input, shape index: {}]
  %s6 = inlined_call_operand.vmem [shape: f32[1,128], index: 6, kind: input, shape index: {}]
  %s7 = inlined_call_operand.hbm [shape: f32[8,128], index: 7, kind: output, shape index: {}]
  %s8 = sld [smem:[#allocation0]]
  $region107: #{tpu_custom_call.1} parent=0
    _
  %s10 = ssub.s32 1, %s8
  %s11 = scalar_select 0, %s10, %s8
  $region1: #{tpu_custom_call.1} parent=0
    #allocation8 [shape = 'u8[131072]{0}', space=vmem, size = 0x20000, scoped, tag = 'input window, operand 2']
    #allocation9 [shape = 's32[2]{0}', space=sflag, size = 0x8, scoped, tag = 'scoped memory for tpu_custom_call.1']
    #allocation10 [shape = 's32[2]{0}', space=sflag, size = 0x8, scoped, tag = 'scoped memory for tpu_custom_call.1']
    #allocation11 [shape = 'u8[2048]{0}', space=vmem, size = 0x800, scoped, tag = 'input window, operand 3']
    #allocation12 [shape = 's32[2]{0}', space=sflag, size = 0x8, scoped, tag = 'scoped memory for tpu_custom_call.1']
    #allocation13 [shape = 'u8[4096]{0}', space=vmem, size = 0x1000, scoped, tag = 'output window, operand 0, single buffered']
    %12 = vsyncpa [#allocation9], 0
    %s13 = scalar_lea.sflag [#allocation9], 1
    %14 = vsyncpa %s13, 0
    %15 = vsyncpa [#allocation12], 0
    %s16 = scalar_lea.sflag [#allocation12], 1
    %17 = vsyncpa %s16, 0
    %18 = vsyncpa [#allocation10], 0
    loop: start=0, step=1, limit=5
    $region2: #{tpu_custom_call.1} parent=1 // loop_pre_header
      _
    $region3: #{tpu_custom_call.1} parent=1 // loop_header
      %s20 = sphi 0, %s24
      %p21 = scmp.ge.s32.totalorder %s20, 5
      %s30 = sphi 0, %s32
      %s33 = sphi 0, %s30
      %s34 = sphi 0, %s33
      %s50 = sphi 0, %s34
      %s56 = sphi 0, %s58
      %s59 = sphi 0, %s56
      %s60 = sphi 0, %s59
      %s76 = sphi 0, %s60
      %s80 = sphi 0, %s80
      %s82 = sphi 0, %s80
      %s83 = sphi 0, %s82
      %s97 = sphi 0, %s83
    $region4: #{tpu_custom_call.1} parent=1 // loop_header_branch
      %23 = sbr.rel (%p21) target = $region8
    $region5: #{tpu_custom_call.1} parent=1 // loop_body
      %s25 = ssub.s32 %s20, 1
      %s26 = ssub.s32 %s20, 2
      %s27 = sadd.s32 %s20, 1
      %s28 = ssub.s32 %s20, %s27
      %p29 = scmp.eq.s32.totalorder %s28, 0
      %s31 = sadd.s32 %s30, 1
      %s32 = scalar_select %p29, %s30, %s31
      %p35 = pneg %p29
      %p36 = scmp.eq.s32.totalorder %s20, 2
      %p37 = por %p35, %p36
      %p38 = scmp.ne.s32.totalorder %s30, %s33
      %p39 = scmp.eq.s32.totalorder %s20, 0
      %p40 = por %p38, %p39
      %p41 = scmp.ne.s32.totalorder %s30, %s33
      %p42 = scmp.eq.s32.totalorder %s25, 2
      %p43 = por %p41, %p42
      %p44 = scmp.ne.s32.totalorder %s33, %s34
      %p45 = scmp.eq.s32.totalorder %s25, 0
      %p46 = por %p44, %p45
      %p47 = scmp.ne.s32.totalorder %s33, %s34
      %p48 = scmp.eq.s32.totalorder %s26, 2
      %p49 = por %p47, %p48
      %p51 = scmp.ne.s32.totalorder %s34, %s50
      %p52 = scmp.eq.s32.totalorder %s26, 0
      %p53 = por %p51, %p52
      %s54 = ssub.s32 %s20, %s27
      %p55 = scmp.eq.s32.totalorder %s54, 0
      %s57 = sadd.s32 %s56, 1
      %s58 = scalar_select %p55, %s56, %s57
      %p61 = pneg %p55
      %p62 = scmp.eq.s32.totalorder %s20, 2
      %p63 = por %p61, %p62
      %p64 = scmp.ne.s32.totalorder %s56, %s59
      %p65 = scmp.eq.s32.totalorder %s20, 0
      %p66 = por %p64, %p65
      %p67 = scmp.ne.s32.totalorder %s56, %s59
      %p68 = scmp.eq.s32.totalorder %s25, 2
      %p69 = por %p67, %p68
      %p70 = scmp.ne.s32.totalorder %s59, %s60
      %p71 = scmp.eq.s32.totalorder %s25, 0
      %p72 = por %p70, %p71
      %p73 = scmp.ne.s32.totalorder %s59, %s60
      %p74 = scmp.eq.s32.totalorder %s26, 2
      %p75 = por %p73, %p74
      %p77 = scmp.ne.s32.totalorder %s60, %s76
      %p78 = scmp.eq.s32.totalorder %s26, 0
      %p79 = por %p77, %p78
      %s81 = sadd.s32 %s80, 1
      %p84 = scmp.eq.s32.totalorder %s20, 2
      %p85 = scmp.ne.s32.totalorder %s80, %s82
      %p86 = scmp.eq.s32.totalorder %s20, 0
      %p87 = por %p85, %p86
      %p88 = scmp.ne.s32.totalorder %s80, %s82
      %p89 = scmp.eq.s32.totalorder %s25, 2
      %p90 = por %p88, %p89
      %p91 = scmp.ne.s32.totalorder %s82, %s83
      %p92 = scmp.eq.s32.totalorder %s25, 0
      %p93 = por %p91, %p92
      %p94 = scmp.ne.s32.totalorder %s82, %s83
      %p95 = scmp.eq.s32.totalorder %s26, 2
      %p96 = por %p94, %p95
      %p98 = scmp.ne.s32.totalorder %s83, %s97
      %p99 = scmp.eq.s32.totalorder %s26, 0
      %p100 = por %p98, %p99
      %p101 = scmp.le.s32.totalorder 1, %s20
      %p102 = scmp.lt.s32.totalorder %s20, 4
      %p103 = pnand %p101, %p102
      %p104 = pneg %p103
      // Predicated region
      $region9: #{tpu_custom_call.1} parent=5 // pred_check
        _
      $region10: #{tpu_custom_call.1} parent=5 // pred_check_branch
        %106 = sbr.rel (%p103) target = $region12
      $region11: #{tpu_custom_call.1} parent=5 // pred_region
        %s107 = ssub.s32 %s20, 1
      $region12: #{tpu_custom_call.1} parent=5 // pred_fallthru
        _
      %p108 = scmp.lt.s32.totalorder %s20, 3
      // Predicated region
      $region13: #{tpu_custom_call.1} parent=5 // pred_check
        %p109 = pneg %p108
      $region14: #{tpu_custom_call.1} parent=5 // pred_check_branch
        %111 = sbr.rel (%p109) target = $region16
      $region15: #{tpu_custom_call.1} parent=5 // pred_region
        // Predicated region
        $region17: #{tpu_custom_call.1} parent=15 // pred_check
          %p112 = pneg %p40
        $region18: #{tpu_custom_call.1} parent=15 // pred_check_branch
          %114 = sbr.rel (%p112) target = $region20
        $region19: #{tpu_custom_call.1} parent=15 // pred_region
          %s115 = sand.u32 %s30, 1
          %s116 = scalar_lea.sflag [#allocation9], %s115
          %s117 = sand.u32 %s30, 1
          %s118 = smul.addr %s117, 128
          %s119 = scalar_lea.vmem [#allocation8], %s118
          %s121 = ssub.s32 2048, 2048
          %122 = vsyncadd %s116, %s121
          %s123 = smul.addr %s20, 32
          %s124 = smul.addr %s123, 64
          %s125 = scalar_lea.hbm %s2, %s124
          %s126 = sshll.u32 %s119, 4
          %s127 = int_to_ptr.vmem [resolvable:$true] %s126
          %132 = dma.hbm_to_vmem [thread:$0]  %s125, 2048, %s127, %s116, 64, 64, 4
        $region20: #{tpu_custom_call.1} parent=15 // pred_fallthru
          _
        // Predicated region
        $region21: #{tpu_custom_call.1} parent=15 // pred_check
          %p133 = pneg %p66
        $region22: #{tpu_custom_call.1} parent=15 // pred_check_branch
          %135 = sbr.rel (%p133) target = $region24
        $region23: #{tpu_custom_call.1} parent=15 // pred_region
          %s136 = sand.u32 %s56, 1
          %s137 = scalar_lea.sflag [#allocation12], %s136
          %s138 = sand.u32 %s56, 1
          %s139 = smul.addr %s138, 2
          %s140 = scalar_lea.vmem [#allocation11], %s139
          %s142 = ssub.s32 32, 32
          %143 = vsyncadd %s137, %s142
          %s144 = smul.addr %s20, 2
          %s145 = smul.addr %s144, 16
          %s146 = scalar_lea.hbm %s3, %s145
          %s147 = sshll.u32 %s140, 4
          %s148 = int_to_ptr.vmem [resolvable:$true] %s147
          %153 = dma.hbm_to_vmem [thread:$0]  %s146, 32, %s148, %s137, 16, 16, 1
        $region24: #{tpu_custom_call.1} parent=15 // pred_fallthru
          _
      $region16: #{tpu_custom_call.1} parent=5 // pred_fallthru
        _
      %p154 = scmp.le.s32.totalorder 1, %s20
      %p155 = scmp.lt.s32.totalorder %s20, 4
      %p156 = pnand %p154, %p155
      %p157 = pneg %p156
      // Predicated region
      $region25: #{tpu_custom_call.1} parent=5 // pred_check
        _
      $region26: #{tpu_custom_call.1} parent=5 // pred_check_branch
        %159 = sbr.rel (%p156) target = $region28
      $region27: #{tpu_custom_call.1} parent=5 // pred_region
        %s160 = ssub.s32 %s20, 1
        %s161 = sand.u32 %s33, 1
        %s162 = scalar_lea.sflag [#allocation9], %s161
        %s163 = sand.u32 %s33, 1
        %s164 = smul.addr %s163, 128
        %s165 = scalar_lea.vmem [#allocation8], %s164
        // Predicated region
        $region29: #{tpu_custom_call.1} parent=27 // pred_check
          %p166 = pneg %p46
        $region30: #{tpu_custom_call.1} parent=27 // pred_check_branch
          %168 = sbr.rel (%p166) target = $region32
        $region31: #{tpu_custom_call.1} parent=27 // pred_region
          %169 = dma.done %s162, 2048
        $region32: #{tpu_custom_call.1} parent=27 // pred_fallthru
          _
        %s170 = sand.u32 %s59, 1
        %s171 = scalar_lea.sflag [#allocation12], %s170
        %s172 = sand.u32 %s59, 1
        %s173 = smul.addr %s172, 2
        %s174 = scalar_lea.vmem [#allocation11], %s173
        // Predicated region
        $region33: #{tpu_custom_call.1} parent=27 // pred_check
          %p175 = pneg %p72
        $region34: #{tpu_custom_call.1} parent=27 // pred_check_branch
          %177 = sbr.rel (%p175) target = $region36
        $region35: #{tpu_custom_call.1} parent=27 // pred_region
          %178 = dma.done %s171, 32
        $region36: #{tpu_custom_call.1} parent=27 // pred_fallthru
          _
        %s179 = sand.u32 %s33, 1
        %s180 = scalar_lea.sflag [#allocation9], %s179
        %s181 = sand.u32 %s33, 1
        %s182 = smul.addr %s181, 128
        %s183 = scalar_lea.vmem [#allocation8], %s182
        %p184 = pneg %p46
        %p185 = pneg %p43
        %s186 = sand.u32 %s59, 1
        %s187 = scalar_lea.sflag [#allocation12], %s186
        %s188 = sand.u32 %s59, 1
        %s189 = smul.addr %s188, 2
        %s190 = scalar_lea.vmem [#allocation11], %s189
        %p191 = pneg %p72
        %p192 = pneg %p69
        %p193 = pneg %p93
        %p194 = pneg %p90
        %p196 = scmp.eq.s32.totalorder %s25, 0
        // Predicated region
        $region37: #{tpu_custom_call.1} parent=27 // pred_check
          %p197 = pneg %p196
        $region38: #{tpu_custom_call.1} parent=27 // pred_check_branch
          %199 = sbr.rel (%p197) target = $region40
        $region39: #{tpu_custom_call.1} parent=27 // pred_region
          // Predicated region
          $region41: #{tpu_custom_call.1} parent=39 // pred_check
            _
          $region42: #{tpu_custom_call.1} parent=39 // pred_check_branch
            %201 = sbr.rel target = $region44
          $region43: #{tpu_custom_call.1} parent=39 // pred_region
            %202 = sst [smem:[#allocation16]] [#allocation15]
            %203 = sst [smem:[#allocation17]] [#allocation14]
          $region44: #{tpu_custom_call.1} parent=39 // pred_fallthru
            _
          %205 = shalt.err (0)
          %s207 = sshll.u32 [#allocation2], 4
          %s208 = int_to_ptr.vmem [resolvable:$true] %s207
          %210 = dma.hbm_to_vmem [thread:$0]  %s0, 1024, %s208, [#allocation7]
          %s211 = scalar_lea.sflag [#allocation7], 1
          // Predicated region
          $region45: #{tpu_custom_call.1} parent=39 // pred_check
            _
          $region46: #{tpu_custom_call.1} parent=39 // pred_check_branch
            %213 = sbr.rel target = $region48
          $region47: #{tpu_custom_call.1} parent=39 // pred_region
            %214 = sst [smem:[#allocation16]] [#allocation19]
            %215 = sst [smem:[#allocation17]] [#allocation18]
          $region48: #{tpu_custom_call.1} parent=39 // pred_fallthru
            _
          %217 = shalt.err (0)
          %s219 = sshll.u32 [#allocation3], 4
          %s220 = int_to_ptr.vmem [resolvable:$true] %s219
          %222 = dma.hbm_to_vmem [thread:$0]  %s1, 1024, %s220, %s211
          %s223 = smul.u32 4, 16
          %s224 = smul.u32 %s223, 1
          %s225 = sshll.u32 %s224, 4
          %226 = dma.done [#allocation7], %s225
          %s227 = sshll.u32 %s224, 4
          %228 = dma.done %s211, %s227
          %229 = vst [vmem:[#allocation13] sm:$0xff] 0.0
        $region40: #{tpu_custom_call.1} parent=27 // pred_fallthru
          _
        %p230 = scmp.eq.s32.totalorder %s25, 1
        // Predicated region
        $region49: #{tpu_custom_call.1} parent=27 // pred_check
          %p231 = pneg %p230
        $region50: #{tpu_custom_call.1} parent=27 // pred_check_branch
          %233 = sbr.rel (%p231) target = $region52
        $region51: #{tpu_custom_call.1} parent=27 // pred_region
          %s234 = scalar_lea.sflag [#allocation7], 2
          // Predicated region
          $region53: #{tpu_custom_call.1} parent=51 // pred_check
            _
          $region54: #{tpu_custom_call.1} parent=51 // pred_check_branch
            %236 = sbr.rel target = $region56
          $region55: #{tpu_custom_call.1} parent=51 // pred_region
            %237 = sst [smem:[#allocation16]] [#allocation21]
            %238 = sst [smem:[#allocation17]] [#allocation20]
          $region56: #{tpu_custom_call.1} parent=51 // pred_fallthru
            _
          %240 = shalt.err (0)
          %s242 = sshll.u32 [#allocation4], 4
          %s243 = int_to_ptr.vmem [resolvable:$true] %s242
          %245 = dma.hbm_to_vmem [thread:$0]  %s4, 128, %s243, %s234
          %s246 = scalar_lea.sflag [#allocation7], 3
          // Predicated region
          $region57: #{tpu_custom_call.1} parent=51 // pred_check
            _
          $region58: #{tpu_custom_call.1} parent=51 // pred_check_branch
            %248 = sbr.rel target = $region60
          $region59: #{tpu_custom_call.1} parent=51 // pred_region
            %249 = sst [smem:[#allocation16]] [#allocation23]
            %250 = sst [smem:[#allocation17]] [#allocation22]
          $region60: #{tpu_custom_call.1} parent=51 // pred_fallthru
            _
          %252 = shalt.err (0)
          %s254 = sshll.u32 [#allocation5], 4
          %s255 = int_to_ptr.vmem [resolvable:$true] %s254
          %257 = dma.hbm_to_vmem [thread:$0]  %s5, 2048, %s255, %s246
          %s258 = scalar_lea.sflag [#allocation7], 4
          %p260 = scmp.lt.u32.totalorder 1, 8
          %p261 = pneg %p260
          // Predicated region
          $region61: #{tpu_custom_call.1} parent=51 // pred_check
            _
          $region62: #{tpu_custom_call.1} parent=51 // pred_check_branch
            %263 = sbr.rel (%p260) target = $region64
          $region63: #{tpu_custom_call.1} parent=51 // pred_region
            %s279 = sand.u32 1, 7
            %p280 = scmp.eq.s32.totalorder %s279, 0
            %p281 = pneg %p280
            // Predicated region
            $region76: #{tpu_custom_call.1} parent=63 // pred_check
              _
            $region77: #{tpu_custom_call.1} parent=63 // pred_check_branch
              %283 = sbr.rel (%p280) target = $region79
            $region78: #{tpu_custom_call.1} parent=63 // pred_region
              %s284 = sand.u32 1, 7
              %s285 = ssub.s32 1, %s284
              %s286 = scalar_lea.vmem %s6, %s285
              %s287 = ssub.s32 1, %s284
              %s288 = scalar_lea.vmem [#allocation6], %s287
              %s289 = sshll.u32 1, %s284
              %s290 = ssub.s32 %s289, 1
              loop: start=0, step=1, limit=1
              $region80: #{tpu_custom_call.1} parent=78 // loop_pre_header
                _
              $region81: #{tpu_custom_call.1} parent=78 // loop_header
                %s292 = sphi 0, %s296
                %p293 = scmp.ge.s32.totalorder %s292, 1
                %s297 = sphi %s286, %s286
                %s298 = sphi %s288, %s288
              $region82: #{tpu_custom_call.1} parent=78 // loop_header_branch
                %295 = sbr.rel (%p293) target = $region86
              $region83: #{tpu_custom_call.1} parent=78 // loop_body
                %v299 = vld [vmem:[%s297] sm:%s290]
                %300 = vst [vmem:[%s298] sm:%s290] %v299
              $region84: #{tpu_custom_call.1} parent=78 // loop_footer
                %s296 = sadd.s32 1, %s292
              $region85: #{tpu_custom_call.1} parent=78 // loop_footer_branch
                %291 = sbr.rel target = $region81
              $region86: #{tpu_custom_call.1} parent=78 // loop_exit
                _
            $region79: #{tpu_custom_call.1} parent=63 // pred_fallthru
              _
          $region64: #{tpu_custom_call.1} parent=51 // pred_fallthru
            _
          // Predicated region
          $region65: #{tpu_custom_call.1} parent=51 // pred_check
            %p264 = pneg %p260
          $region66: #{tpu_custom_call.1} parent=51 // pred_check_branch
            %266 = sbr.rel (%p264) target = $region68
          $region67: #{tpu_custom_call.1} parent=51 // pred_region
            %s267 = sshll.u32 1, 1
            %s268 = ssub.s32 %s267, 1
            loop: start=0, step=1, limit=1
            $region69: #{tpu_custom_call.1} parent=67 // loop_pre_header
              _
            $region70: #{tpu_custom_call.1} parent=67 // loop_header
              %s270 = sphi 0, %s274
              %p271 = scmp.ge.s32.totalorder %s270, 1
              %s275 = sphi %s6, %s6
              %s276 = sphi [#allocation6], [#allocation6]
            $region71: #{tpu_custom_call.1} parent=67 // loop_header_branch
              %273 = sbr.rel (%p271) target = $region75
            $region72: #{tpu_custom_call.1} parent=67 // loop_body
              %v277 = vld [vmem:[%s275] sm:%s268]
              %278 = vst [vmem:[%s276] sm:%s268] %v277
            $region73: #{tpu_custom_call.1} parent=67 // loop_footer
              %s274 = sadd.s32 1, %s270
            $region74: #{tpu_custom_call.1} parent=67 // loop_footer_branch
              %269 = sbr.rel target = $region70
            $region75: #{tpu_custom_call.1} parent=67 // loop_exit
              _
          $region68: #{tpu_custom_call.1} parent=51 // pred_fallthru
            _
          // Predicated region
          $region87: #{tpu_custom_call.1} parent=51 // pred_check
            _
          $region88: #{tpu_custom_call.1} parent=51 // pred_check_branch
            %303 = sbr.rel (0) target = $region90
          $region89: #{tpu_custom_call.1} parent=51 // pred_region
            %304 = vsyncadd %s258, 16
          $region90: #{tpu_custom_call.1} parent=51 // pred_fallthru
            _
        $region52: #{tpu_custom_call.1} parent=27 // pred_fallthru
          _
        %v305 = vld [vmem:[#allocation3] sm:$0xf]
        %v306 = vld [vmem:[#allocation3 + $0x4] sm:$0xf]
        %v307 = vld [vmem:[#allocation3 + $0x8] sm:$0xf]
        %v308 = vld [vmem:[#allocation3 + $0xc] sm:$0xf]
        %v309 = vld [vmem:[#allocation3 + $0x10] sm:$0xf]
        %v310 = vld [vmem:[#allocation3 + $0x14] sm:$0xf]
        %v311 = vld [vmem:[#allocation3 + $0x18] sm:$0xf]
        %v312 = vld [vmem:[#allocation3 + $0x1c] sm:$0xf]
        %v313 = vld [vmem:[#allocation3 + $0x20] sm:$0xf]
        %v314 = vld [vmem:[#allocation3 + $0x24] sm:$0xf]
        %v315 = vld [vmem:[#allocation3 + $0x28] sm:$0xf]
        %v316 = vld [vmem:[#allocation3 + $0x2c] sm:$0xf]
        %v317 = vld [vmem:[#allocation3 + $0x30] sm:$0xf]
        %v318 = vld [vmem:[#allocation3 + $0x34] sm:$0xf]
        %v319 = vld [vmem:[#allocation3 + $0x38] sm:$0xf]
        %v320 = vld [vmem:[#allocation3 + $0x3c] sm:$0xf]
        %v321 = vld [vmem:[#allocation2] sm:$0xf]
        %v322 = vld [vmem:[#allocation2 + $0x4] sm:$0xf]
        %v323 = vld [vmem:[#allocation2 + $0x8] sm:$0xf]
        %v324 = vld [vmem:[#allocation2 + $0xc] sm:$0xf]
        %v325 = vld [vmem:[#allocation2 + $0x10] sm:$0xf]
        %v326 = vld [vmem:[#allocation2 + $0x14] sm:$0xf]
        %v327 = vld [vmem:[#allocation2 + $0x18] sm:$0xf]
        %v328 = vld [vmem:[#allocation2 + $0x1c] sm:$0xf]
        %v329 = vld [vmem:[#allocation2 + $0x20] sm:$0xf]
        %v330 = vld [vmem:[#allocation2 + $0x24] sm:$0xf]
        %v331 = vld [vmem:[#allocation2 + $0x28] sm:$0xf]
        %v332 = vld [vmem:[#allocation2 + $0x2c] sm:$0xf]
        %v333 = vld [vmem:[#allocation2 + $0x30] sm:$0xf]
        %v334 = vld [vmem:[#allocation2 + $0x34] sm:$0xf]
        %v335 = vld [vmem:[#allocation2 + $0x38] sm:$0xf]
        %v336 = vld [vmem:[#allocation2 + $0x3c] sm:$0xf]
        %v353 = vunpack.c.l.b16 %v321
        %v354 = vunpack.c.l.b16 %v322
        %v355 = vunpack.c.l.b16 %v323
        %v356 = vunpack.c.l.b16 %v324
        %v357 = vunpack.c.l.b16 %v325
        %v358 = vunpack.c.l.b16 %v326
        %v359 = vunpack.c.l.b16 %v327
        %v360 = vunpack.c.l.b16 %v328
        %v361 = vunpack.c.l.b16 %v329
        %v362 = vunpack.c.l.b16 %v330
        %v363 = vunpack.c.l.b16 %v331
        %v364 = vunpack.c.l.b16 %v332
        %v365 = vunpack.c.l.b16 %v333
        %v366 = vunpack.c.l.b16 %v334
        %v367 = vunpack.c.l.b16 %v335
        %v368 = vunpack.c.l.b16 %v336
        %v369 = vpack.c.b16 %v354, %v353
        %v370 = vpack.c.b16 %v356, %v355
        %v371 = vpack.c.b16 %v358, %v357
        %v372 = vpack.c.b16 %v360, %v359
        %v373 = vpack.c.b16 %v362, %v361
        %v374 = vpack.c.b16 %v364, %v363
        %v375 = vpack.c.b16 %v366, %v365
        %v376 = vpack.c.b16 %v368, %v367
        %v401 = vunpack.c.l.b16 %v305
        %v402 = vunpack.c.l.b16 %v306
        %v403 = vunpack.c.l.b16 %v307
        %v404 = vunpack.c.l.b16 %v308
        %v405 = vunpack.c.l.b16 %v309
        %v406 = vunpack.c.l.b16 %v310
        %v407 = vunpack.c.l.b16 %v311
        %v408 = vunpack.c.l.b16 %v312
        %v409 = vunpack.c.l.b16 %v313
        %v410 = vunpack.c.l.b16 %v314
        %v411 = vunpack.c.l.b16 %v315
        %v412 = vunpack.c.l.b16 %v316
        %v413 = vunpack.c.l.b16 %v317
        %v414 = vunpack.c.l.b16 %v318
        %v415 = vunpack.c.l.b16 %v319
        %v416 = vunpack.c.l.b16 %v320
        %v417 = vpack.c.b16 %v402, %v401
        %v418 = vpack.c.b16 %v404, %v403
        %v419 = vpack.c.b16 %v406, %v405
        %v420 = vpack.c.b16 %v408, %v407
        %v421 = vpack.c.b16 %v410, %v409
        %v422 = vpack.c.b16 %v412, %v411
        %v423 = vpack.c.b16 %v414, %v413
        %v424 = vpack.c.b16 %v416, %v415
        %433 = vmatprep.subr.bf16.mxu0 0
        %434 = vmatpush1.bf16.msra.mxu0 %v424
        %435 = vmatprep.subr.bf16.mxu0 0
        %436 = vmatpush1.bf16.msra.mxu0 %v423
        %437 = vmatprep.subr.bf16.mxu0 0
        %438 = vmatpush1.bf16.msra.mxu0 %v422
        %439 = vmatprep.subr.bf16.mxu0 0
        %440 = vmatpush1.bf16.msra.mxu0 %v421
        %441 = vmatprep.subr.bf16.mxu0 0
        %442 = vmatpush1.bf16.msra.mxu0 %v420
        %443 = vmatprep.subr.bf16.mxu0 0
        %444 = vmatpush1.bf16.msra.mxu0 %v419
        %445 = vmatprep.subr.bf16.mxu0 0
        %446 = vmatpush1.bf16.msra.mxu0 %v418
        %447 = vmatprep.subr.bf16.mxu0 0
        %448 = vmatpush1.bf16.msra.mxu0 %v417
        %449 = vmatprep.subr.bf16.mxu0 0
        %450 = vmatpush2.bf16.msra.mxu0 0
        %451 = vmatprep.subr.bf16.mxu0 0
        %452 = vmatpush2.bf16.msra.mxu0 0
        %453 = vmatprep.subr.bf16.mxu0 0
        %454 = vmatpush2.bf16.msra.mxu0 0
        %455 = vmatprep.subr.bf16.mxu0 0
        %456 = vmatpush2.bf16.msra.mxu0 0
        %457 = vmatprep.subr.bf16.mxu0 0
        %458 = vmatpush2.bf16.msra.mxu0 0
        %459 = vmatprep.subr.bf16.mxu0 0
        %460 = vmatpush2.bf16.msra.mxu0 0
        %461 = vmatprep.subr.bf16.mxu0 0
        %462 = vmatpush2.bf16.msra.mxu0 0
        %463 = vmatprep.subr.bf16.mxu0 0
        %464 = vmatpush2.bf16.msra.mxu0 0
        %465 = vmatprep.mubr.bf16.mxu0 0
        %466 = vmatmul.mubr.bf16.gmra.mxu0 %v369
        %v467 = vpop.f32.mrf.mxu0
        %v468 = vadd.f32 0.0, %v467
        %v469 = vpop.f32.mrf.mxu0
        %v470 = vpop.f32.mrf.mxu0
        %v471 = vadd.f32 0.0, %v470
        %v472 = vpop.f32.mrf.mxu0
        %473 = vmatprep.mubr.bf16.mxu0 0
        %474 = vmatmul.mubr.bf16.gmra.mxu0 %v370
        %v475 = vpop.f32.mrf.mxu0
        %v476 = vadd.f32 0.0, %v475
        %v477 = vpop.f32.mrf.mxu0
        %v478 = vpop.f32.mrf.mxu0
        %v479 = vadd.f32 0.0, %v478
        %v480 = vpop.f32.mrf.mxu0
        %481 = vmatprep.mubr.bf16.mxu0 0
        %482 = vmatmul.mubr.bf16.gmra.mxu0 %v371
        %v483 = vpop.f32.mrf.mxu0
        %v484 = vadd.f32 0.0, %v483
        %v485 = vpop.f32.mrf.mxu0
        %v486 = vpop.f32.mrf.mxu0
        %v487 = vadd.f32 0.0, %v486
        %v488 = vpop.f32.mrf.mxu0
        %489 = vmatprep.mubr.bf16.mxu0 0
        %490 = vmatmul.mubr.bf16.gmra.mxu0 %v372
        %v491 = vpop.f32.mrf.mxu0
        %v492 = vadd.f32 0.0, %v491
        %v493 = vpop.f32.mrf.mxu0
        %v494 = vpop.f32.mrf.mxu0
        %v495 = vadd.f32 0.0, %v494
        %v496 = vpop.f32.mrf.mxu0
        %497 = vmatprep.mubr.bf16.mxu0 0
        %498 = vmatmul.mubr.bf16.gmra.mxu0 %v373
        %v499 = vpop.f32.mrf.mxu0
        %v500 = vadd.f32 0.0, %v499
        %v501 = vpop.f32.mrf.mxu0
        %v502 = vpop.f32.mrf.mxu0
        %v503 = vadd.f32 0.0, %v502
        %v504 = vpop.f32.mrf.mxu0
        %505 = vmatprep.mubr.bf16.mxu0 0
        %506 = vmatmul.mubr.bf16.gmra.mxu0 %v374
        %v507 = vpop.f32.mrf.mxu0
        %v508 = vadd.f32 0.0, %v507
        %v509 = vpop.f32.mrf.mxu0
        %v510 = vpop.f32.mrf.mxu0
        %v511 = vadd.f32 0.0, %v510
        %v512 = vpop.f32.mrf.mxu0
        %513 = vmatprep.mubr.bf16.mxu0 0
        %514 = vmatmul.mubr.bf16.gmra.mxu0 %v375
        %v515 = vpop.f32.mrf.mxu0
        %v516 = vadd.f32 0.0, %v515
        %v517 = vpop.f32.mrf.mxu0
        %v518 = vpop.f32.mrf.mxu0
        %v519 = vadd.f32 0.0, %v518
        %v520 = vpop.f32.mrf.mxu0
        %521 = vmatprep.mubr.bf16.mxu0 0
        %522 = vmatmul.mubr.bf16.gmra.mxu0 %v376
        %v523 = vpop.f32.mrf.mxu0
        %v524 = vadd.f32 0.0, %v523
        %v525 = vpop.f32.mrf.mxu0
        %v526 = vpop.f32.mrf.mxu0
        %v527 = vadd.f32 0.0, %v526
        %v528 = vpop.f32.mrf.mxu0
        %529 = vdwg.mxu0
        %v530 = vpack.c.bf16 %v471, %v468
        %v531 = vpack.c.bf16 %v479, %v476
        %v532 = vpack.c.bf16 %v487, %v484
        %v533 = vpack.c.bf16 %v495, %v492
        %v534 = vpack.c.bf16 %v503, %v500
        %v535 = vpack.c.bf16 %v511, %v508
        %v536 = vpack.c.bf16 %v519, %v516
        %v537 = vpack.c.bf16 %v527, %v524
        %v538 = vld [vmem:[%s165] sm:$0xf]
        %v539 = vld [vmem:[%s165 + $0x4] sm:$0xf]
        %v540 = vld [vmem:[%s165 + $0x8] sm:$0xf]
        %v541 = vld [vmem:[%s165 + $0xc] sm:$0xf]
        %v542 = vld [vmem:[%s165 + $0x10] sm:$0xf]
        %v543 = vld [vmem:[%s165 + $0x14] sm:$0xf]
        %v544 = vld [vmem:[%s165 + $0x18] sm:$0xf]
        %v545 = vld [vmem:[%s165 + $0x1c] sm:$0xf]
        %v546 = vld [vmem:[%s165 + $0x20] sm:$0xf]
        %v547 = vld [vmem:[%s165 + $0x24] sm:$0xf]
        %v548 = vld [vmem:[%s165 + $0x28] sm:$0xf]
        %v549 = vld [vmem:[%s165 + $0x2c] sm:$0xf]
        %v550 = vld [vmem:[%s165 + $0x30] sm:$0xf]
        %v551 = vld [vmem:[%s165 + $0x34] sm:$0xf]
        %v552 = vld [vmem:[%s165 + $0x38] sm:$0xf]
        %v553 = vld [vmem:[%s165 + $0x3c] sm:$0xf]
        %v554 = vld [vmem:[%s174] sm:$0x1]
        %v556 = vlaneseq
        %v557 = vshrl.u32 %v556, 7
        %v558 = vsub.s32 0, %v557
        %v559 = vrot.slane %v554, %v558
        %v577 = vunpack.c.l.b16 %v538
        %v578 = vunpack.c.l.b16 %v539
        %v579 = vunpack.c.l.b16 %v540
        %v580 = vunpack.c.l.b16 %v541
        %v581 = vunpack.c.l.b16 %v542
        %v582 = vunpack.c.l.b16 %v543
        %v583 = vunpack.c.l.b16 %v544
        %v584 = vunpack.c.l.b16 %v545
        %v585 = vunpack.c.l.b16 %v546
        %v586 = vunpack.c.l.b16 %v547
        %v587 = vunpack.c.l.b16 %v548
        %v588 = vunpack.c.l.b16 %v549
        %v589 = vunpack.c.l.b16 %v550
        %v590 = vunpack.c.l.b16 %v551
        %v591 = vunpack.c.l.b16 %v552
        %v592 = vunpack.c.l.b16 %v553
        %v593 = vpack.c.b16 %v578, %v577
        %v594 = vpack.c.b16 %v580, %v579
        %v595 = vpack.c.b16 %v582, %v581
        %v596 = vpack.c.b16 %v584, %v583
        %v597 = vpack.c.b16 %v586, %v585
        %v598 = vpack.c.b16 %v588, %v587
        %v599 = vpack.c.b16 %v590, %v589
        %v600 = vpack.c.b16 %v592, %v591
        %609 = vmatprep.subr.bf16.mxu0 0
        %610 = vmatpush1.bf16.msra.mxu0 %v600
        %611 = vmatprep.subr.bf16.mxu0 0
        %612 = vmatpush1.bf16.msra.mxu0 %v599
        %613 = vmatprep.subr.bf16.mxu0 0
        %614 = vmatpush1.bf16.msra.mxu0 %v598
        %615 = vmatprep.subr.bf16.mxu0 0
        %616 = vmatpush1.bf16.msra.mxu0 %v597
        %617 = vmatprep.subr.bf16.mxu0 0
        %618 = vmatpush1.bf16.msra.mxu0 %v596
        %619 = vmatprep.subr.bf16.mxu0 0
        %620 = vmatpush1.bf16.msra.mxu0 %v595
        %621 = vmatprep.subr.bf16.mxu0 0
        %622 = vmatpush1.bf16.msra.mxu0 %v594
        %623 = vmatprep.subr.bf16.mxu0 0
        %624 = vmatpush1.bf16.msra.mxu0 %v593
        %625 = vmatprep.subr.bf16.mxu0 0
        %626 = vmatpush2.bf16.msra.mxu0 0
        %627 = vmatprep.subr.bf16.mxu0 0
        %628 = vmatpush2.bf16.msra.mxu0 0
        %629 = vmatprep.subr.bf16.mxu0 0
        %630 = vmatpush2.bf16.msra.mxu0 0
        %631 = vmatprep.subr.bf16.mxu0 0
        %632 = vmatpush2.bf16.msra.mxu0 0
        %633 = vmatprep.subr.bf16.mxu0 0
        %634 = vmatpush2.bf16.msra.mxu0 0
        %635 = vmatprep.subr.bf16.mxu0 0
        %636 = vmatpush2.bf16.msra.mxu0 0
        %637 = vmatprep.subr.bf16.mxu0 0
        %638 = vmatpush2.bf16.msra.mxu0 0
        %639 = vmatprep.subr.bf16.mxu0 0
        %640 = vmatpush2.bf16.msra.mxu0 0
        %641 = vmatprep.mubr.bf16.mxu0 0
        %642 = vmatmul.mubr.bf16.gmra.mxu0 %v530
        %v643 = vpop.f32.mrf.mxu0
        %v644 = vadd.f32 %v559, %v643
        %v645 = vpop.f32.mrf.mxu0
        %v646 = vpop.f32.mrf.mxu0
        %v647 = vadd.f32 %v559, %v646
        %v648 = vpop.f32.mrf.mxu0
        %649 = vmatprep.mubr.bf16.mxu0 0
        %650 = vmatmul.mubr.bf16.gmra.mxu0 %v531
        %v651 = vpop.f32.mrf.mxu0
        %v652 = vadd.f32 %v559, %v651
        %v653 = vpop.f32.mrf.mxu0
        %v654 = vpop.f32.mrf.mxu0
        %v655 = vadd.f32 %v559, %v654
        %v656 = vpop.f32.mrf.mxu0
        %657 = vmatprep.mubr.bf16.mxu0 0
        %658 = vmatmul.mubr.bf16.gmra.mxu0 %v532
        %v659 = vpop.f32.mrf.mxu0
        %v660 = vadd.f32 %v559, %v659
        %v661 = vpop.f32.mrf.mxu0
        %v662 = vpop.f32.mrf.mxu0
        %v663 = vadd.f32 %v559, %v662
        %v664 = vpop.f32.mrf.mxu0
        %665 = vmatprep.mubr.bf16.mxu0 0
        %666 = vmatmul.mubr.bf16.gmra.mxu0 %v533
        %v667 = vpop.f32.mrf.mxu0
        %v668 = vadd.f32 %v559, %v667
        %v669 = vpop.f32.mrf.mxu0
        %v670 = vpop.f32.mrf.mxu0
        %v671 = vadd.f32 %v559, %v670
        %v672 = vpop.f32.mrf.mxu0
        %673 = vmatprep.mubr.bf16.mxu0 0
        %674 = vmatmul.mubr.bf16.gmra.mxu0 %v534
        %v675 = vpop.f32.mrf.mxu0
        %v676 = vadd.f32 %v559, %v675
        %v677 = vpop.f32.mrf.mxu0
        %v678 = vpop.f32.mrf.mxu0
        %v679 = vadd.f32 %v559, %v678
        %v680 = vpop.f32.mrf.mxu0
        %681 = vmatprep.mubr.bf16.mxu0 0
        %682 = vmatmul.mubr.bf16.gmra.mxu0 %v535
        %v683 = vpop.f32.mrf.mxu0
        %v684 = vadd.f32 %v559, %v683
        %v685 = vpop.f32.mrf.mxu0
        %v686 = vpop.f32.mrf.mxu0
        %v687 = vadd.f32 %v559, %v686
        %v688 = vpop.f32.mrf.mxu0
        %689 = vmatprep.mubr.bf16.mxu0 0
        %690 = vmatmul.mubr.bf16.gmra.mxu0 %v536
        %v691 = vpop.f32.mrf.mxu0
        %v692 = vadd.f32 %v559, %v691
        %v693 = vpop.f32.mrf.mxu0
        %v694 = vpop.f32.mrf.mxu0
        %v695 = vadd.f32 %v559, %v694
        %v696 = vpop.f32.mrf.mxu0
        %697 = vmatprep.mubr.bf16.mxu0 0
        %698 = vmatmul.mubr.bf16.gmra.mxu0 %v537
        %v699 = vpop.f32.mrf.mxu0
        %v700 = vadd.f32 %v559, %v699
        %v701 = vpop.f32.mrf.mxu0
        %v702 = vpop.f32.mrf.mxu0
        %v703 = vadd.f32 %v559, %v702
        %v704 = vpop.f32.mrf.mxu0
        %705 = vdwg.mxu0
        %v706 = vmax.f32 %v644, 0.0
        %v707 = vmax.f32 %v647, 0.0
        %v708 = vmax.f32 %v652, 0.0
        %v709 = vmax.f32 %v655, 0.0
        %v710 = vmax.f32 %v660, 0.0
        %v711 = vmax.f32 %v663, 0.0
        %v712 = vmax.f32 %v668, 0.0
        %v713 = vmax.f32 %v671, 0.0
        %v714 = vmax.f32 %v676, 0.0
        %v715 = vmax.f32 %v679, 0.0
        %v716 = vmax.f32 %v684, 0.0
        %v717 = vmax.f32 %v687, 0.0
        %v718 = vmax.f32 %v692, 0.0
        %v719 = vmax.f32 %v695, 0.0
        %v720 = vmax.f32 %v700, 0.0
        %v721 = vmax.f32 %v703, 0.0
        %v722 = vpack.c.bf16 %v707, %v706
        %v723 = vpack.c.bf16 %v709, %v708
        %v724 = vpack.c.bf16 %v711, %v710
        %v725 = vpack.c.bf16 %v713, %v712
        %v726 = vpack.c.bf16 %v715, %v714
        %v727 = vpack.c.bf16 %v717, %v716
        %v728 = vpack.c.bf16 %v719, %v718
        %v729 = vpack.c.bf16 %v721, %v720
        %s730 = scalar_lea.vmem %s165, 64 [#allocation8]
        %v731 = vld [vmem:[%s730] sm:$0xf]
        %v732 = vld [vmem:[%s730 + $0x4] sm:$0xf]
        %v733 = vld [vmem:[%s730 + $0x8] sm:$0xf]
        %v734 = vld [vmem:[%s730 + $0xc] sm:$0xf]
        %v735 = vld [vmem:[%s730 + $0x10] sm:$0xf]
        %v736 = vld [vmem:[%s730 + $0x14] sm:$0xf]
        %v737 = vld [vmem:[%s730 + $0x18] sm:$0xf]
        %v738 = vld [vmem:[%s730 + $0x1c] sm:$0xf]
        %v739 = vld [vmem:[%s730 + $0x20] sm:$0xf]
        %v740 = vld [vmem:[%s730 + $0x24] sm:$0xf]
        %v741 = vld [vmem:[%s730 + $0x28] sm:$0xf]
        %v742 = vld [vmem:[%s730 + $0x2c] sm:$0xf]
        %v743 = vld [vmem:[%s730 + $0x30] sm:$0xf]
        %v744 = vld [vmem:[%s730 + $0x34] sm:$0xf]
        %v745 = vld [vmem:[%s730 + $0x38] sm:$0xf]
        %v746 = vld [vmem:[%s730 + $0x3c] sm:$0xf]
        %s747 = scalar_lea.vmem %s174, 1 [#allocation11]
        %v748 = vld [vmem:[%s747] sm:$0x1]
        %v750 = vlaneseq
        %v751 = vshrl.u32 %v750, 7
        %v752 = vsub.s32 0, %v751
        %v753 = vrot.slane %v748, %v752
        %v771 = vunpack.c.l.b16 %v731
        %v772 = vunpack.c.l.b16 %v732
        %v773 = vunpack.c.l.b16 %v733
        %v774 = vunpack.c.l.b16 %v734
        %v775 = vunpack.c.l.b16 %v735
        %v776 = vunpack.c.l.b16 %v736
        %v777 = vunpack.c.l.b16 %v737
        %v778 = vunpack.c.l.b16 %v738
        %v779 = vunpack.c.l.b16 %v739
        %v780 = vunpack.c.l.b16 %v740
        %v781 = vunpack.c.l.b16 %v741
        %v782 = vunpack.c.l.b16 %v742
        %v783 = vunpack.c.l.b16 %v743
        %v784 = vunpack.c.l.b16 %v744
        %v785 = vunpack.c.l.b16 %v745
        %v786 = vunpack.c.l.b16 %v746
        %v787 = vpack.c.b16 %v772, %v771
        %v788 = vpack.c.b16 %v774, %v773
        %v789 = vpack.c.b16 %v776, %v775
        %v790 = vpack.c.b16 %v778, %v777
        %v791 = vpack.c.b16 %v780, %v779
        %v792 = vpack.c.b16 %v782, %v781
        %v793 = vpack.c.b16 %v784, %v783
        %v794 = vpack.c.b16 %v786, %v785
        %803 = vmatprep.subr.bf16.mxu0 0
        %804 = vmatpush1.bf16.msra.mxu0 %v794
        %805 = vmatprep.subr.bf16.mxu0 0
        %806 = vmatpush1.bf16.msra.mxu0 %v793
        %807 = vmatprep.subr.bf16.mxu0 0
        %808 = vmatpush1.bf16.msra.mxu0 %v792
        %809 = vmatprep.subr.bf16.mxu0 0
        %810 = vmatpush1.bf16.msra.mxu0 %v791
        %811 = vmatprep.subr.bf16.mxu0 0
        %812 = vmatpush1.bf16.msra.mxu0 %v790
        %813 = vmatprep.subr.bf16.mxu0 0
        %814 = vmatpush1.bf16.msra.mxu0 %v789
        %815 = vmatprep.subr.bf16.mxu0 0
        %816 = vmatpush1.bf16.msra.mxu0 %v788
        %817 = vmatprep.subr.bf16.mxu0 0
        %818 = vmatpush1.bf16.msra.mxu0 %v787
        %819 = vmatprep.subr.bf16.mxu0 0
        %820 = vmatpush2.bf16.msra.mxu0 0
        %821 = vmatprep.subr.bf16.mxu0 0
        %822 = vmatpush2.bf16.msra.mxu0 0
        %823 = vmatprep.subr.bf16.mxu0 0
        %824 = vmatpush2.bf16.msra.mxu0 0
        %825 = vmatprep.subr.bf16.mxu0 0
        %826 = vmatpush2.bf16.msra.mxu0 0
        %827 = vmatprep.subr.bf16.mxu0 0
        %828 = vmatpush2.bf16.msra.mxu0 0
        %829 = vmatprep.subr.bf16.mxu0 0
        %830 = vmatpush2.bf16.msra.mxu0 0
        %831 = vmatprep.subr.bf16.mxu0 0
        %832 = vmatpush2.bf16.msra.mxu0 0
        %833 = vmatprep.subr.bf16.mxu0 0
        %834 = vmatpush2.bf16.msra.mxu0 0
        %835 = vmatprep.mubr.bf16.mxu0 0
        %836 = vmatmul.mubr.bf16.gmra.mxu0 %v722
        %v837 = vpop.f32.mrf.mxu0
        %v838 = vadd.f32 %v753, %v837
        %v839 = vpop.f32.mrf.mxu0
        %v840 = vpop.f32.mrf.mxu0
        %v841 = vadd.f32 %v753, %v840
        %v842 = vpop.f32.mrf.mxu0
        %843 = vmatprep.mubr.bf16.mxu0 0
        %844 = vmatmul.mubr.bf16.gmra.mxu0 %v723
        %v845 = vpop.f32.mrf.mxu0
        %v846 = vadd.f32 %v753, %v845
        %v847 = vpop.f32.mrf.mxu0
        %v848 = vpop.f32.mrf.mxu0
        %v849 = vadd.f32 %v753, %v848
        %v850 = vpop.f32.mrf.mxu0
        %851 = vmatprep.mubr.bf16.mxu0 0
        %852 = vmatmul.mubr.bf16.gmra.mxu0 %v724
        %v853 = vpop.f32.mrf.mxu0
        %v854 = vadd.f32 %v753, %v853
        %v855 = vpop.f32.mrf.mxu0
        %v856 = vpop.f32.mrf.mxu0
        %v857 = vadd.f32 %v753, %v856
        %v858 = vpop.f32.mrf.mxu0
        %859 = vmatprep.mubr.bf16.mxu0 0
        %860 = vmatmul.mubr.bf16.gmra.mxu0 %v725
        %v861 = vpop.f32.mrf.mxu0
        %v862 = vadd.f32 %v753, %v861
        %v863 = vpop.f32.mrf.mxu0
        %v864 = vpop.f32.mrf.mxu0
        %v865 = vadd.f32 %v753, %v864
        %v866 = vpop.f32.mrf.mxu0
        %867 = vmatprep.mubr.bf16.mxu0 0
        %868 = vmatmul.mubr.bf16.gmra.mxu0 %v726
        %v869 = vpop.f32.mrf.mxu0
        %v870 = vadd.f32 %v753, %v869
        %v871 = vpop.f32.mrf.mxu0
        %v872 = vpop.f32.mrf.mxu0
        %v873 = vadd.f32 %v753, %v872
        %v874 = vpop.f32.mrf.mxu0
        %875 = vmatprep.mubr.bf16.mxu0 0
        %876 = vmatmul.mubr.bf16.gmra.mxu0 %v727
        %v877 = vpop.f32.mrf.mxu0
        %v878 = vadd.f32 %v753, %v877
        %v879 = vpop.f32.mrf.mxu0
        %v880 = vpop.f32.mrf.mxu0
        %v881 = vadd.f32 %v753, %v880
        %v882 = vpop.f32.mrf.mxu0
        %883 = vmatprep.mubr.bf16.mxu0 0
        %884 = vmatmul.mubr.bf16.gmra.mxu0 %v728
        %v885 = vpop.f32.mrf.mxu0
        %v886 = vadd.f32 %v753, %v885
        %v887 = vpop.f32.mrf.mxu0
        %v888 = vpop.f32.mrf.mxu0
        %v889 = vadd.f32 %v753, %v888
        %v890 = vpop.f32.mrf.mxu0
        %891 = vmatprep.mubr.bf16.mxu0 0
        %892 = vmatmul.mubr.bf16.gmra.mxu0 %v729
        %v893 = vpop.f32.mrf.mxu0
        %v894 = vadd.f32 %v753, %v893
        %v895 = vpop.f32.mrf.mxu0
        %v896 = vpop.f32.mrf.mxu0
        %v897 = vadd.f32 %v753, %v896
        %v898 = vpop.f32.mrf.mxu0
        %899 = vdwg.mxu0
        %v900 = vmax.f32 %v838, 0.0
        %v901 = vmax.f32 %v841, 0.0
        %v902 = vmax.f32 %v846, 0.0
        %v903 = vmax.f32 %v849, 0.0
        %v904 = vmax.f32 %v854, 0.0
        %v905 = vmax.f32 %v857, 0.0
        %v906 = vmax.f32 %v862, 0.0
        %v907 = vmax.f32 %v865, 0.0
        %v908 = vmax.f32 %v870, 0.0
        %v909 = vmax.f32 %v873, 0.0
        %v910 = vmax.f32 %v878, 0.0
        %v911 = vmax.f32 %v881, 0.0
        %v912 = vmax.f32 %v886, 0.0
        %v913 = vmax.f32 %v889, 0.0
        %v914 = vmax.f32 %v894, 0.0
        %v915 = vmax.f32 %v897, 0.0
        %v916 = vpack.c.bf16 %v901, %v900
        %v917 = vpack.c.bf16 %v903, %v902
        %v918 = vpack.c.bf16 %v905, %v904
        %v919 = vpack.c.bf16 %v907, %v906
        %v920 = vpack.c.bf16 %v909, %v908
        %v921 = vpack.c.bf16 %v911, %v910
        %v922 = vpack.c.bf16 %v913, %v912
        %v923 = vpack.c.bf16 %v915, %v914
        %v932 = vunpack.c.l.b16 %v916
        %v933 = vunpack.c.h.b16 %v916
        %v934 = vunpack.c.l.b16 %v917
        %v935 = vunpack.c.h.b16 %v917
        %v936 = vunpack.c.l.b16 %v918
        %v937 = vunpack.c.h.b16 %v918
        %v938 = vunpack.c.l.b16 %v919
        %v939 = vunpack.c.h.b16 %v919
        %v940 = vunpack.c.l.b16 %v920
        %v941 = vunpack.c.h.b16 %v920
        %v942 = vunpack.c.l.b16 %v921
        %v943 = vunpack.c.h.b16 %v921
        %v944 = vunpack.c.l.b16 %v922
        %v945 = vunpack.c.h.b16 %v922
        %v946 = vunpack.c.l.b16 %v923
        %v947 = vunpack.c.h.b16 %v923
        %v948 = vpack.c.b16 %v932, %v932
        %v949 = vpack.c.b16 %v933, %v933
        %v950 = vpack.c.b16 %v934, %v934
        %v951 = vpack.c.b16 %v935, %v935
        %v952 = vpack.c.b16 %v936, %v936
        %v953 = vpack.c.b16 %v937, %v937
        %v954 = vpack.c.b16 %v938, %v938
        %v955 = vpack.c.b16 %v939, %v939
        %v956 = vpack.c.b16 %v940, %v940
        %v957 = vpack.c.b16 %v941, %v941
        %v958 = vpack.c.b16 %v942, %v942
        %v959 = vpack.c.b16 %v943, %v943
        %v960 = vpack.c.b16 %v944, %v944
        %v961 = vpack.c.b16 %v945, %v945
        %v962 = vpack.c.b16 %v946, %v946
        %v963 = vpack.c.b16 %v947, %v947
        %980 = vst [vmem:[#allocation3] sm:$0xf] %v948
        %981 = vst [vmem:[#allocation3 + $0x4] sm:$0xf] %v949
        %982 = vst [vmem:[#allocation3 + $0x8] sm:$0xf] %v950
        %983 = vst [vmem:[#allocation3 + $0xc] sm:$0xf] %v951
        %984 = vst [vmem:[#allocation3 + $0x10] sm:$0xf] %v952
        %985 = vst [vmem:[#allocation3 + $0x14] sm:$0xf] %v953
        %986 = vst [vmem:[#allocation3 + $0x18] sm:$0xf] %v954
        %987 = vst [vmem:[#allocation3 + $0x1c] sm:$0xf] %v955
        %988 = vst [vmem:[#allocation3 + $0x20] sm:$0xf] %v956
        %989 = vst [vmem:[#allocation3 + $0x24] sm:$0xf] %v957
        %990 = vst [vmem:[#allocation3 + $0x28] sm:$0xf] %v958
        %991 = vst [vmem:[#allocation3 + $0x2c] sm:$0xf] %v959
        %992 = vst [vmem:[#allocation3 + $0x30] sm:$0xf] %v960
        %993 = vst [vmem:[#allocation3 + $0x34] sm:$0xf] %v961
        %994 = vst [vmem:[#allocation3 + $0x38] sm:$0xf] %v962
        %995 = vst [vmem:[#allocation3 + $0x3c] sm:$0xf] %v963
        %p996 = scmp.eq.s32.totalorder %s25, 2
        // Predicated region
        $region91: #{tpu_custom_call.1} parent=27 // pred_check
          %p997 = pneg %p996
        $region92: #{tpu_custom_call.1} parent=27 // pred_check_branch
          %999 = sbr.rel (%p997) target = $region94
        $region93: #{tpu_custom_call.1} parent=27 // pred_region
          %s1000 = scalar_lea.sflag [#allocation7], 2
          %s1001 = smul.u32 8, 1
          %s1002 = sshll.u32 %s1001, 4
          %1003 = dma.done %s1000, %s1002
          %s1004 = scalar_lea.sflag [#allocation7], 3
          %s1005 = smul.u32 128, 1
          %s1006 = sshll.u32 %s1005, 4
          %1007 = dma.done %s1004, %s1006
          %s1008 = scalar_lea.sflag [#allocation7], 4
          %s1009 = smul.u32 1, 1
          %s1010 = sshll.u32 %s1009, 4
          %1011 = dma.done %s1008, %s1010
          %v1012 = vld [vmem:[#allocation4] sm:$0xff]
          %1013 = vmatprep.subr.mxu0 0.0
          %1014 = vmatpush1.msra.mxu0 %v915
          %1015 = vmatprep.subr.mxu0 0.0
          %1016 = vmatpush1.msra.mxu0 %v914
          %1017 = vmatprep.subr.mxu0 0.0
          %1018 = vmatpush1.msra.mxu0 %v913
          %1019 = vmatprep.subr.mxu0 0.0
          %1020 = vmatpush1.msra.mxu0 %v912
          %1021 = vmatprep.subr.mxu0 0.0
          %1022 = vmatpush1.msra.mxu0 %v911
          %1023 = vmatprep.subr.mxu0 0.0
          %1024 = vmatpush1.msra.mxu0 %v910
          %1025 = vmatprep.subr.mxu0 0.0
          %1026 = vmatpush1.msra.mxu0 %v909
          %1027 = vmatprep.subr.mxu0 0.0
          %1028 = vmatpush1.msra.mxu0 %v908
          %1029 = vmatprep.subr.mxu0 0.0
          %1030 = vmatpush1.msra.mxu0 %v907
          %1031 = vmatprep.subr.mxu0 0.0
          %1032 = vmatpush1.msra.mxu0 %v906
          %1033 = vmatprep.subr.mxu0 0.0
          %1034 = vmatpush1.msra.mxu0 %v905
          %1035 = vmatprep.subr.mxu0 0.0
          %1036 = vmatpush1.msra.mxu0 %v904
          %1037 = vmatprep.subr.mxu0 0.0
          %1038 = vmatpush1.msra.mxu0 %v903
          %1039 = vmatprep.subr.mxu0 0.0
          %1040 = vmatpush1.msra.mxu0 %v902
          %1041 = vmatprep.subr.mxu0 0.0
          %1042 = vmatpush1.msra.mxu0 %v901
          %1043 = vmatprep.subr.mxu0 0.0
          %1044 = vmatpush1.msra.mxu0 %v900
          %1045 = vmatprep.subr.mxu0 0.0
          %1046 = vmatpush2.msra.mxu0 0.0
          %1047 = vmatprep.subr.mxu0 0.0
          %1048 = vmatpush2.msra.mxu0 0.0
          %1049 = vmatprep.subr.mxu0 0.0
          %1050 = vmatpush2.msra.mxu0 0.0
          %1051 = vmatprep.subr.mxu0 0.0
          %1052 = vmatpush2.msra.mxu0 0.0
          %1053 = vmatprep.subr.mxu0 0.0
          %1054 = vmatpush2.msra.mxu0 0.0
          %1055 = vmatprep.subr.mxu0 0.0
          %1056 = vmatpush2.msra.mxu0 0.0
          %1057 = vmatprep.subr.mxu0 0.0
          %1058 = vmatpush2.msra.mxu0 0.0
          %1059 = vmatprep.subr.mxu0 0.0
          %1060 = vmatpush2.msra.mxu0 0.0
          %1061 = vmatprep.subr.mxu0 0.0
          %1062 = vmatpush2.msra.mxu0 0.0
          %1063 = vmatprep.subr.mxu0 0.0
          %1064 = vmatpush2.msra.mxu0 0.0
          %1065 = vmatprep.subr.mxu0 0.0
          %1066 = vmatpush2.msra.mxu0 0.0
          %1067 = vmatprep.subr.mxu0 0.0
          %1068 = vmatpush2.msra.mxu0 0.0
          %1069 = vmatprep.subr.mxu0 0.0
          %1070 = vmatpush2.msra.mxu0 0.0
          %1071 = vmatprep.subr.mxu0 0.0
          %1072 = vmatpush2.msra.mxu0 0.0
          %1073 = vmatprep.subr.mxu0 0.0
          %1074 = vmatpush2.msra.mxu0 0.0
          %1075 = vmatprep.subr.mxu0 0.0
          %1076 = vmatpush2.msra.mxu0 0.0
          %1077 = vmatprep.mubr.f32.mxu0 0.0
          %1078 = vmatmul.mubr.f32.gmra.mxu0 %v1012
          %v1079 = vpop.f32.mrf.mxu0
          %v1080 = vadd.f32 0.0, %v1079
          %v1081 = vpop.f32.mrf.mxu0
          %1082 = vdwg.mxu0
          %v1083 = vld [vmem:[#allocation5] sm:$0xff]
          %v1084 = vld [vmem:[#allocation5 + $0x8] sm:$0xff]
          %v1085 = vld [vmem:[#allocation5 + $0x10] sm:$0xff]
          %v1086 = vld [vmem:[#allocation5 + $0x18] sm:$0xff]
          %v1087 = vld [vmem:[#allocation5 + $0x20] sm:$0xff]
          %v1088 = vld [vmem:[#allocation5 + $0x28] sm:$0xff]
          %v1089 = vld [vmem:[#allocation5 + $0x30] sm:$0xff]
          %v1090 = vld [vmem:[#allocation5 + $0x38] sm:$0xff]
          %v1091 = vld [vmem:[#allocation5 + $0x40] sm:$0xff]
          %v1092 = vld [vmem:[#allocation5 + $0x48] sm:$0xff]
          %v1093 = vld [vmem:[#allocation5 + $0x50] sm:$0xff]
          %v1094 = vld [vmem:[#allocation5 + $0x58] sm:$0xff]
          %v1095 = vld [vmem:[#allocation5 + $0x60] sm:$0xff]
          %v1096 = vld [vmem:[#allocation5 + $0x68] sm:$0xff]
          %v1097 = vld [vmem:[#allocation5 + $0x70] sm:$0xff]
          %v1098 = vld [vmem:[#allocation5 + $0x78] sm:$0xff]
          %v1099 = vld [vmem:[#allocation6] sm:$0x1]
          %v1101 = vlaneseq
          %v1102 = vshrl.u32 %v1101, 7
          %v1103 = vsub.s32 0, %v1102
          %v1104 = vrot.slane %v1099, %v1103
          %1106 = vmatprep.subr.mxu0 0.0
          %1107 = vmatpush1.msra.mxu0 %v1098
          %1108 = vmatprep.subr.mxu0 0.0
          %1109 = vmatpush1.msra.mxu0 %v1097
          %1110 = vmatprep.subr.mxu0 0.0
          %1111 = vmatpush1.msra.mxu0 %v1096
          %1112 = vmatprep.subr.mxu0 0.0
          %1113 = vmatpush1.msra.mxu0 %v1095
          %1114 = vmatprep.subr.mxu0 0.0
          %1115 = vmatpush1.msra.mxu0 %v1094
          %1116 = vmatprep.subr.mxu0 0.0
          %1117 = vmatpush1.msra.mxu0 %v1093
          %1118 = vmatprep.subr.mxu0 0.0
          %1119 = vmatpush1.msra.mxu0 %v1092
          %1120 = vmatprep.subr.mxu0 0.0
          %1121 = vmatpush1.msra.mxu0 %v1091
          %1122 = vmatprep.subr.mxu0 0.0
          %1123 = vmatpush1.msra.mxu0 %v1090
          %1124 = vmatprep.subr.mxu0 0.0
          %1125 = vmatpush1.msra.mxu0 %v1089
          %1126 = vmatprep.subr.mxu0 0.0
          %1127 = vmatpush1.msra.mxu0 %v1088
          %1128 = vmatprep.subr.mxu0 0.0
          %1129 = vmatpush1.msra.mxu0 %v1087
          %1130 = vmatprep.subr.mxu0 0.0
          %1131 = vmatpush1.msra.mxu0 %v1086
          %1132 = vmatprep.subr.mxu0 0.0
          %1133 = vmatpush1.msra.mxu0 %v1085
          %1134 = vmatprep.subr.mxu0 0.0
          %1135 = vmatpush1.msra.mxu0 %v1084
          %1136 = vmatprep.subr.mxu0 0.0
          %1137 = vmatpush1.msra.mxu0 %v1083
          %1138 = vmatprep.subr.mxu0 0.0
          %1139 = vmatpush2.msra.mxu0 0.0
          %1140 = vmatprep.subr.mxu0 0.0
          %1141 = vmatpush2.msra.mxu0 0.0
          %1142 = vmatprep.subr.mxu0 0.0
          %1143 = vmatpush2.msra.mxu0 0.0
          %1144 = vmatprep.subr.mxu0 0.0
          %1145 = vmatpush2.msra.mxu0 0.0
          %1146 = vmatprep.subr.mxu0 0.0
          %1147 = vmatpush2.msra.mxu0 0.0
          %1148 = vmatprep.subr.mxu0 0.0
          %1149 = vmatpush2.msra.mxu0 0.0
          %1150 = vmatprep.subr.mxu0 0.0
          %1151 = vmatpush2.msra.mxu0 0.0
          %1152 = vmatprep.subr.mxu0 0.0
          %1153 = vmatpush2.msra.mxu0 0.0
          %1154 = vmatprep.subr.mxu0 0.0
          %1155 = vmatpush2.msra.mxu0 0.0
          %1156 = vmatprep.subr.mxu0 0.0
          %1157 = vmatpush2.msra.mxu0 0.0
          %1158 = vmatprep.subr.mxu0 0.0
          %1159 = vmatpush2.msra.mxu0 0.0
          %1160 = vmatprep.subr.mxu0 0.0
          %1161 = vmatpush2.msra.mxu0 0.0
          %1162 = vmatprep.subr.mxu0 0.0
          %1163 = vmatpush2.msra.mxu0 0.0
          %1164 = vmatprep.subr.mxu0 0.0
          %1165 = vmatpush2.msra.mxu0 0.0
          %1166 = vmatprep.subr.mxu0 0.0
          %1167 = vmatpush2.msra.mxu0 0.0
          %1168 = vmatprep.subr.mxu0 0.0
          %1169 = vmatpush2.msra.mxu0 0.0
          %1170 = vmatprep.mubr.f32.mxu0 0.0
          %1171 = vmatmul.mubr.f32.gmra.mxu0 %v1080
          %v1172 = vpop.f32.mrf.mxu0
          %v1173 = vadd.f32 %v1104, %v1172
          %v1174 = vpop.f32.mrf.mxu0
          %1175 = vdwg.mxu0
          %1176 = vst [vmem:[#allocation13] sm:$0xff] %v1173
        $region94: #{tpu_custom_call.1} parent=27 // pred_fallthru
          _
        // Predicated region
        $region95: #{tpu_custom_call.1} parent=27 // pred_check
          %p1177 = pneg %p90
        $region96: #{tpu_custom_call.1} parent=27 // pred_check_branch
          %1179 = sbr.rel (%p1177) target = $region98
        $region97: #{tpu_custom_call.1} parent=27 // pred_region
          %s1181 = ssub.s32 128, 128
          %1182 = vsyncadd [#allocation10], %s1181
          %s1184 = sshll.u32 [#allocation13], 4
          %s1185 = int_to_ptr.vmem [resolvable:$true] %s1184
          %1187 = dma.vmem_to_hbm [thread:$0]  %s1185, 128, %s7, [#allocation10]
        $region98: #{tpu_custom_call.1} parent=27 // pred_fallthru
          _
        // Predicated region
        $region99: #{tpu_custom_call.1} parent=27 // pred_check
          %p1188 = pneg %p90
        $region100: #{tpu_custom_call.1} parent=27 // pred_check_branch
          %1190 = sbr.rel (%p1188) target = $region102
        $region101: #{tpu_custom_call.1} parent=27 // pred_region
          %1191 = dma.done [#allocation10], 128
        $region102: #{tpu_custom_call.1} parent=27 // pred_fallthru
          _
      $region28: #{tpu_custom_call.1} parent=5 // pred_fallthru
        _
      %p1192 = scmp.le.s32.totalorder 2, %s20
      // Predicated region
      $region103: #{tpu_custom_call.1} parent=5 // pred_check
        %p1193 = pneg %p1192
      $region104: #{tpu_custom_call.1} parent=5 // pred_check_branch
        %1195 = sbr.rel (%p1193) target = $region106
      $region105: #{tpu_custom_call.1} parent=5 // pred_region
        %s1196 = ssub.s32 %s20, 2
      $region106: #{tpu_custom_call.1} parent=5 // pred_fallthru
        _
    $region6: #{tpu_custom_call.1} parent=1 // loop_footer
      %s24 = sadd.s32 1, %s20
    $region7: #{tpu_custom_call.1} parent=1 // loop_footer_branch
      %19 = sbr.rel target = $region3
    $region8: #{tpu_custom_call.1} parent=1 // loop_exit
      _
    %1197 = vsyncpa [#allocation9], 1
    %s1198 = scalar_lea.sflag [#allocation9], 1
    %1199 = vsyncpa %s1198, 1
    %1200 = vsyncpa [#allocation12], 1
    %s1201 = scalar_lea.sflag [#allocation12], 1
    %1202 = vsyncpa %s1201, 1
    %1203 = vsyncpa [#allocation10], 1
    %s1204 = scalar_lea.sflag [#allocation10], 1
    %1205 = vsyncpa %s1204, 1
  %1206 = vsyncmov [#allocation7]
  %s1207 = vpop.sfrf %1206
  %p1208 = scmp.eq.s32.totalorder %s1207, 0
  %p1209 = pneg %p1208
  %1211 = shalt.err (%p1209)
  %s1212 = scalar_lea.sflag [#allocation7], 1
  %1213 = vsyncmov %s1212
  %s1214 = vpop.sfrf %1213
  %p1215 = scmp.eq.s32.totalorder %s1214, 0
  %p1216 = pneg %p1215
  %1218 = shalt.err (%p1216)
  %s1219 = scalar_lea.sflag [#allocation7], 2
  %1220 = vsyncmov %s1219
  %s1221 = vpop.sfrf %1220
  %p1222 = scmp.eq.s32.totalorder %s1221, 0
  %p1223 = pneg %p1222
  %1225 = shalt.err (%p1223)
  %s1226 = scalar_lea.sflag [#allocation7], 3
  %1227 = vsyncmov %s1226
  %s1228 = vpop.sfrf %1227
  %p1229 = scmp.eq.s32.totalorder %s1228, 0
  %p1230 = pneg %p1229
  %1232 = shalt.err (%p1230)
  %s1233 = scalar_lea.sflag [#allocation7], 4
  %1234 = vsyncmov %s1233
  %s1235 = vpop.sfrf %1234
  %p1236 = scmp.eq.s32.totalorder %s1235, 0
  %p1237 = pneg %p1236
  %1239 = shalt.err (%p1237)

</llo_original>
